<compile_context>
chip_gen: v6e
topology: v6e:2x2x1
jax: 0.10.0
libtpu: 0.0.40
codegen_flags: <defaults>
</compile_context>

<pallas_src>
import functools

import jax
import jax.numpy as jnp
from jax import lax
from jax.experimental import pallas as pl
from jax.experimental.pallas import tpu as pltpu

LANE = 128


def _round_up(x, m):
    return ((x + m - 1) // m) * m


# ---------------------------------------------------------------------------
# One-time probes: roll direction + VMEM capacity
# ---------------------------------------------------------------------------
_ROLL_MODE = None   # "np"  : pltpu.roll(x, s)[i] == x[(i - s) % n]  (jnp.roll semantics)
                    # "inv" : pltpu.roll(x, s)[i] == x[(i + s) % n]
                    # "none": roll unavailable -> use the legacy sublane-slice path


def _detect_roll_mode():
    """Probe pltpu.roll's rotation direction on the second-minor axis (run eagerly)."""
    global _ROLL_MODE
    if _ROLL_MODE is not None:
        return _ROLL_MODE

    def probe(x_ref, o_ref):
        o_ref[...] = pltpu.roll(x_ref[...], shift=1, axis=2)

    try:
        x = lax.broadcasted_iota(jnp.float32, (1, 2, 16, 128), 2)
        out = pl.pallas_call(
            probe, out_shape=jax.ShapeDtypeStruct((1, 2, 16, 128), jnp.float32))(x)
        out = jax.device_get(out)
        v0, v1 = int(out[0, 0, 0, 0]), int(out[0, 0, 1, 0])
        if v0 == 15 and v1 == 0:
            _ROLL_MODE = "np"
        elif v0 == 1 and v1 == 2:
            _ROLL_MODE = "inv"
        else:
            _ROLL_MODE = "none"
    except Exception:
        # Under a jit trace or if roll does not lower: fall back to the slice path.
        _ROLL_MODE = "none"
    return _ROLL_MODE


def _vmem_budget_bytes():
    """Generation-aware VMEM budget (64 MiB ceiling on v7x, 128 MiB on v5e/v6e)."""
    try:
        cap = int(pltpu.get_tpu_info().vmem_capacity_bytes)
    except Exception:
        cap = 64 * 1024 * 1024          # conservative fallback (v7x-sized)
    return min((cap * 3) // 4, 96 * 1024 * 1024)


def _pick_batch_block(n, r, w_pl, ho, wd, cin, chp, coutp, vmem_bytes):
    """Images per grid step: amortize the ~0.35us/step overhead, stay inside VMEM."""
    f32 = 4
    per_img = (4 * r * w_pl * chp * f32 * 3      # stage-1 output + masked copy + temps
               + ho * wd * chp * f32 * 3         # acc / y2 / bf16 staging
               + ho * wd * coutp * f32 * 2       # y3 + double-buffered output block
               + 4 * r * w_pl * cin * 2 * 2)     # double-buffered bf16 input block
    weights = (cin * chp + chp * coutp) * 2 * 2 + 12 * chp * f32 * 2
    nb = (vmem_bytes // 2 - weights) // max(per_img, 1)
    return int(max(1, min(nb, 8, n)))


# ---------------------------------------------------------------------------
# Fused kernel: 1x1 conv -> 3x3 depthwise (stride 2) -> 1x1 conv, BN folded, ReLU6
# ---------------------------------------------------------------------------
def _fused_kernel(x_ref, m_ref, w1_ref, b1_ref, wdw_ref, b2_ref, w3_ref, b3_ref,
                  o_ref, *, NB, R, W_pl, Ho, Wd, roll_shift):
    """NB images per grid step.

    x_ref  : (NB, 4*R*W_pl, Cin) bf16 -- 2x2 parity planes [ee,eo,oe,oo] of the
                                          spatially padded input, rows flattened.
    m_ref  : (4*R, W_pl, 1) f32       -- validity mask (0 at spatial-pad positions).
    w1_ref : (Cin, Chp) bf16            b1_ref : (1, Chp) f32
    wdw_ref: (9, 1, Chp) f32            b2_ref : (1, Chp) f32
    w3_ref : (Chp, Coutp) bf16          b3_ref : (1, Coutp) f32
    o_ref  : (NB, Ho*Wd, Coutp) f32
    """
    Cin = x_ref.shape[-1]
    Chp = w1_ref.shape[1]
    Coutp = w3_ref.shape[1]

    # ---- stage 1: pointwise conv (bf16 x bf16 -> f32 acc), bias + ReLU6 --------
    x2d = x_ref[...].reshape(NB * 4 * R * W_pl, Cin)
    y = jnp.dot(x2d, w1_ref[...], preferred_element_type=jnp.float32)
    y = jnp.clip(y + b1_ref[...], 0.0, 6.0)
    # mask reproduces the zero spatial padding the depthwise conv expects
    y = y.reshape(NB, 4 * R, W_pl, Chp) * m_ref[...]

    ee = y[:, 0 * R:1 * R]   # padded positions (2r,   2c  )
    eo = y[:, 1 * R:2 * R]   #                  (2r,   2c+1)
    oe = y[:, 2 * R:3 * R]   #                  (2r+1, 2c  )
    oo = y[:, 3 * R:4 * R]   #                  (2r+1, 2c+1)

    # ---- stage 2: 3x3 depthwise stride-2 (BN folded) + bias + ReLU6 ------------
    if roll_shift is not None:
        # XLU roll implements the "+1 column" taps; wrapped columns only affect
        # output columns >= Wo which are discarded by the wrapper.
        ee_s = pltpu.roll(ee, shift=roll_shift, axis=2)
        oe_s = pltpu.roll(oe, shift=roll_shift, axis=2)
        ee_s0 = ee_s[:, 0:Ho, 0:Wd]
        ee_s1 = ee_s[:, 1:Ho + 1, 0:Wd]
        oe_s0 = oe_s[:, 0:Ho, 0:Wd]
    else:
        # Legacy path: W_pl == Wd + 8, so the offset-1 slices are in bounds.
        ee_s0 = ee[:, 0:Ho, 1:Wd + 1]
        ee_s1 = ee[:, 1:Ho + 1, 1:Wd + 1]
        oe_s0 = oe[:, 0:Ho, 1:Wd + 1]

    w = wdw_ref[...]                                  # (9, 1, Chp), k = 3*ki + kj
    acc = ee[:, 0:Ho, 0:Wd] * w[0]
    acc += eo[:, 0:Ho, 0:Wd] * w[1]
    acc += ee_s0 * w[2]
    acc += oe[:, 0:Ho, 0:Wd] * w[3]
    acc += oo[:, 0:Ho, 0:Wd] * w[4]
    acc += oe_s0 * w[5]
    acc += ee[:, 1:Ho + 1, 0:Wd] * w[6]
    acc += eo[:, 1:Ho + 1, 0:Wd] * w[7]
    acc += ee_s1 * w[8]
    y2 = jnp.clip(acc + b2_ref[...], 0.0, 6.0)        # (NB, Ho, Wd, Chp) f32

    # ---- stage 3: pointwise conv (bf16 operands, f32 acc), lane-dense store ----
    y2b = y2.reshape(NB * Ho * Wd, Chp).astype(jnp.bfloat16)
    y3 = jnp.dot(y2b, w3_ref[...], preferred_element_type=jnp.float32)
    y3 = jnp.clip(y3 + b3_ref[...], 0.0, 6.0)
    o_ref[...] = y3.reshape(NB, Ho * Wd, Coutp)


# ---------------------------------------------------------------------------
# Parameter preparation: fold BN, cast matmul weights to bf16, pad channels
# ---------------------------------------------------------------------------
def fold_bn(gamma, beta, mean, var, eps=1e-5):
    scale = gamma / jnp.sqrt(var + eps)
    bias = beta - mean * scale
    return scale.astype(jnp.float32), bias.astype(jnp.float32)


def prepare_params(w1, bn1, w_dw, bn2, w3, bn3, lane_multiple=LANE):
    """w1: (Cin, Ch), w_dw: (3, 3, Ch), w3: (Ch, Cout); bn* = (gamma, beta, mean, var).

    On v6e/v7x pass lane_multiple=256 when channel counts exceed 128 (256-wide MXU).
    """
    _detect_roll_mode()   # run the one-time roll probe eagerly (outside any jit trace)

    cin, ch = w1.shape
    cout = w3.shape[1]
    chp = _round_up(ch, lane_multiple)
    coutp = _round_up(cout, lane_multiple)

    s1, b1 = fold_bn(*bn1)
    s2, b2 = fold_bn(*bn2)
    s3, b3 = fold_bn(*bn3)

    w1f = (jnp.zeros((cin, chp), jnp.float32)
           .at[:, :ch].set(w1 * s1[None, :]).astype(jnp.bfloat16))
    b1p = jnp.zeros((1, chp), jnp.float32).at[:, :ch].set(b1[None, :])
    wdwf = jnp.zeros((9, 1, chp), jnp.float32).at[:, :, :ch].set(
        (w_dw * s2[None, None, :]).reshape(9, 1, ch))
    b2p = jnp.zeros((1, chp), jnp.float32).at[:, :ch].set(b2[None, :])
    w3f = (jnp.zeros((chp, coutp), jnp.float32)
           .at[:ch, :cout].set(w3 * s3[None, :]).astype(jnp.bfloat16))
    b3p = jnp.zeros((1, coutp), jnp.float32).at[:, :cout].set(b3[None, :])
    return (w1f, b1p, wdwf, b2p, w3f, b3p)


# ---------------------------------------------------------------------------
# Wrapper: layout glue (pure XLA) + fused pallas_call
# ---------------------------------------------------------------------------
def _build_inputs(x_nhwc, H, W, R, W_pl):
    """2x2 parity split of the zero-padded input + validity mask (1x data)."""
    N = x_nhwc.shape[0]
    Wo = W // 2
    xp = jnp.pad(x_nhwc, ((0, 0), (1, 1), (1, 1), (0, 0)))

    i = jnp.arange(R)[:, None]
    j = jnp.arange(W_pl)[None, :]
    planes, masks = [], []
    for pr in (0, 1):
        for pc in (0, 1):
            p = xp[:, pr::2, pc::2, :]                              # (N, R, Wo+1, Cin)
            p = jnp.pad(p, ((0, 0), (0, 0), (0, W_pl - (Wo + 1)), (0, 0)))
            planes.append(p)
            valid = ((2 * i + pr >= 1) & (2 * i + pr <= H)
                     & (2 * j + pc >= 1) & (2 * j + pc <= W))
            masks.append(valid.astype(jnp.float32))
    planes = jnp.concatenate(planes, axis=1)                        # (N, 4R, W_pl, Cin)
    planes = planes.reshape(N, 4 * R * W_pl, -1).astype(jnp.bfloat16)
    mask = jnp.concatenate(masks, axis=0)[:, :, None]               # (4R, W_pl, 1)
    return planes, mask


def inverted_residual_extra(x_nchw, kparams, cout, batch_block=None):
    w1f, b1p, wdwf, b2p, w3f, b3p = kparams
    N, Cin, H, W = x_nchw.shape
    assert H % 2 == 0 and W % 2 == 0, "even spatial dims expected (stride-2 block)"
    Ho, Wo = H // 2, W // 2
    R = Ho + 1
    Wd = _round_up(Wo, 8)                     # output width, sublane aligned

    mode = _detect_roll_mode()
    if mode == "none":
        W_pl = Wd + 8                         # legacy slice path needs the extra columns
        roll_shift = None
    else:
        W_pl = _round_up(Wo + 1, 8)           # minimal plane width for the roll path
        roll_shift = (W_pl - 1) if mode == "np" else 1

    Chp, Coutp = w1f.shape[1], w3f.shape[1]
    vmem_budget = _vmem_budget_bytes()
    NB = batch_block or _pick_batch_block(N, R, W_pl, Ho, Wd, Cin, Chp, Coutp, vmem_budget)
    NB = max(1, min(int(NB), N))
    N_pad = _round_up(N, NB)

    x = jnp.transpose(x_nchw, (0, 2, 3, 1)).astype(jnp.float32)     # NHWC
    planes, mask = _build_inputs(x, H, W, R, W_pl)
    if N_pad > N:
        planes = jnp.pad(planes, ((0, N_pad - N), (0, 0), (0, 0)))

    kernel = functools.partial(_fused_kernel, NB=NB, R=R, W_pl=W_pl, Ho=Ho, Wd=Wd,
                               roll_shift=roll_shift)
    out = pl.pallas_call(
        kernel,
        out_shape=jax.ShapeDtypeStruct((N_pad, Ho * Wd, Coutp), jnp.float32),
        grid=(N_pad // NB,),
        in_specs=[
            pl.BlockSpec((NB, 4 * R * W_pl, Cin), lambda n: (n, 0, 0)),
            pl.BlockSpec((4 * R, W_pl, 1), lambda n: (0, 0, 0)),
            pl.BlockSpec((Cin, Chp), lambda n: (0, 0)),
            pl.BlockSpec((1, Chp), lambda n: (0, 0)),
            pl.BlockSpec((9, 1, Chp), lambda n: (0, 0, 0)),
            pl.BlockSpec((1, Chp), lambda n: (0, 0)),
            pl.BlockSpec((Chp, Coutp), lambda n: (0, 0)),
            pl.BlockSpec((1, Coutp), lambda n: (0, 0)),
        ],
        out_specs=pl.BlockSpec((NB, Ho * Wd, Coutp), lambda n: (n, 0, 0)),
        compiler_params=pltpu.CompilerParams(
            dimension_semantics=("parallel",),
            vmem_limit_bytes=int(vmem_budget),
        ),
    )(planes, mask, w1f, b1p, wdwf, b2p, w3f, b3p)

    out = out.reshape(N_pad, Ho, Wd, Coutp)[:N, :, :Wo, :cout]
    return jnp.transpose(out, (0, 3, 1, 2))


# ---------------------------------------------------------------------------
# Pure-JAX reference (lax.conv), using the same bf16-operand / f32-accum policy
# ---------------------------------------------------------------------------
def reference_forward(x_nchw, w1, bn1, w_dw, bn2, w3, bn3):
    s1, b1 = fold_bn(*bn1)
    s2, b2 = fold_bn(*bn2)
    s3, b3 = fold_bn(*bn3)
    Ch = w1.shape[1]
    dn = ("NHWC", "HWIO", "NHWC")
    x = jnp.transpose(x_nchw, (0, 2, 3, 1)).astype(jnp.float32)

    w1f = (w1 * s1[None, :]).astype(jnp.bfloat16).reshape(1, 1, *w1.shape)
    y = lax.conv_general_dilated(x.astype(jnp.bfloat16), w1f, (1, 1), "VALID",
                                 dimension_numbers=dn,
                                 preferred_element_type=jnp.float32)
    y = jnp.clip(y + b1, 0.0, 6.0)

    wdwf = (w_dw * s2[None, None, :]).reshape(3, 3, 1, Ch)
    y = lax.conv_general_dilated(y, wdwf, (2, 2), ((1, 1), (1, 1)),
                                 dimension_numbers=dn, feature_group_count=Ch)
    y = jnp.clip(y + b2, 0.0, 6.0)

    w3f = (w3 * s3[None, :]).astype(jnp.bfloat16).reshape(1, 1, *w3.shape)
    y = lax.conv_general_dilated(y.astype(jnp.bfloat16), w3f, (1, 1), "VALID",
                                 dimension_numbers=dn,
                                 preferred_element_type=jnp.float32)
    y = jnp.clip(y + b3, 0.0, 6.0)
    return jnp.transpose(y, (0, 3, 1, 2))


# ---------------------------------------------------------------------------
if __name__ == "__main__":
    def bn_raw(k, c):
        k1, k2, k3, k4 = jax.random.split(k, 4)
        gamma = 1.0 + 0.1 * jax.random.normal(k1, (c,), jnp.float32)
        beta = 0.1 * jax.random.normal(k2, (c,), jnp.float32)
        mean = 0.1 * jax.random.normal(k3, (c,), jnp.float32)
        var = 0.5 + jnp.abs(jax.random.normal(k4, (c,), jnp.float32)) * 0.5
        return (gamma, beta, mean, var)

    def run_case(key, N, H, W, inp, oup, batch_block=None):
        hidden = oup // 2                      # matches nn module: hidden_dim = oup // 2
        ks = jax.random.split(key, 8)
        x = jax.random.normal(ks[0], (N, inp, H, W), jnp.float32)
        w1 = 0.5 * jax.random.normal(ks[1], (inp, hidden), jnp.float32)     # 1x1 conv
        w_dw = 0.5 * jax.random.normal(ks[2], (3, 3, hidden), jnp.float32)  # 3x3 dw conv
        w3 = 0.5 * jax.random.normal(ks[3], (hidden, oup), jnp.float32)     # 1x1 conv
        bn1 = bn_raw(ks[4], hidden)
        bn2 = bn_raw(ks[5], hidden)
        bn3 = bn_raw(ks[6], oup)

        kparams = prepare_params(w1, bn1, w_dw, bn2, w3, bn3)
        fwd = jax.jit(functools.partial(inverted_residual_extra, kparams=kparams,
                                        cout=oup, batch_block=batch_block))
        out = jax.block_until_ready(fwd(x))
        ref = jax.block_until_ready(reference_forward(x, w1, bn1, w_dw, bn2, w3, bn3))
        assert out.shape == (N, oup, H // 2, W // 2), out.shape
        max_err = float(jnp.max(jnp.abs(out - ref)))
        assert jnp.allclose(out, ref, atol=5e-2, rtol=5e-2), max_err

    key = jax.random.PRNGKey(0)
    k1, k2 = jax.random.split(key)
    # main config (matches the module's typical use at toy scale)
    run_case(k1, N=2, H=16, W=16, inp=4, oup=8)
    # odd output width + batch padding + multi-step grid (exercises roll wrap + mask)
    run_case(k2, N=3, H=10, W=10, inp=4, oup=8, batch_block=2)

    print("KERNEL_OK")
</pallas_src>

<mosaic_0001>
module attributes {stable_mosaic.version = 11 : i64} {
  func.func @probe(%arg0: memref<1x2x16x128xf32, #tpu.memory_space<vmem>>, %arg1: memref<1x2x16x128xf32, #tpu.memory_space<vmem>>) attributes {dimension_semantics = [], scalar_prefetch = 0 : i64, scratch_operands = 0 : i64, tpu.core_type = #tpu.core_type<tc>} {
    %c0 = arith.constant 0 : index
    %c0_0 = arith.constant 0 : index
    %c0_1 = arith.constant 0 : index
    %c0_2 = arith.constant 0 : index
    %0 = vector.load %arg0[%c0, %c0_0, %c0_1, %c0_2] : memref<1x2x16x128xf32, #tpu.memory_space<vmem>>, vector<1x2x16x128xf32>
    %c1_i32 = arith.constant 1 : i32
    %1 = tpu.dynamic_rotate %0 by %c1_i32 dim 2 : vector<1x2x16x128xf32>, i32 -> vector<1x2x16x128xf32>
    %c0_3 = arith.constant 0 : index
    %c0_4 = arith.constant 0 : index
    %c0_5 = arith.constant 0 : index
    %c0_6 = arith.constant 0 : index
    %2 = vector.load %arg1[%c0_3, %c0_4, %c0_5, %c0_6] : memref<1x2x16x128xf32, #tpu.memory_space<vmem>>, vector<1x2x16x128xf32>
    tpu.vector_store %arg1[%c0_3, %c0_4, %c0_5, %c0_6], %1 {strides = array<i32>} : memref<1x2x16x128xf32, #tpu.memory_space<vmem>>, vector<1x2x16x128xf32>,
    return
  }
}

module attributes {stable_mosaic.version = 11 : i64} {
  func.func @_fused_kernel(%arg0: i32, %arg1: memref<2x576x4xbf16, #tpu.memory_space<vmem>>, %arg2: memref<36x16x1xf32, #tpu.memory_space<vmem>>, %arg3: memref<4x128xbf16, #tpu.memory_space<vmem>>, %arg4: memref<1x128xf32, #tpu.memory_space<vmem>>, %arg5: memref<9x1x128xf32, #tpu.memory_space<vmem>>, %arg6: memref<1x128xf32, #tpu.memory_space<vmem>>, %arg7: memref<128x128xbf16, #tpu.memory_space<vmem>>, %arg8: memref<1x128xf32, #tpu.memory_space<vmem>>, %arg9: memref<2x64x128xf32, #tpu.memory_space<vmem>>) attributes {dimension_semantics = [#tpu.dimension_semantics<parallel>], iteration_bounds = array<i64: 1>, scalar_prefetch = 0 : i64, scratch_operands = 0 : i64, tpu.core_type = #tpu.core_type<tc>, window_params = [{transform_indices = @transform_0, window_bounds = array<i64: 2, 576, 4>}, {pipeline_mode = #tpu.pipeline_mode<synchronous>, transform_indices = @transform_1, window_bounds = array<i64: 36, 16, 1>}, {pipeline_mode = #tpu.pipeline_mode<synchronous>, transform_indices = @transform_2, window_bounds = array<i64: 4, 128>}, {pipeline_mode = #tpu.pipeline_mode<synchronous>, transform_indices = @transform_3, window_bounds = array<i64: 1, 128>}, {pipeline_mode = #tpu.pipeline_mode<synchronous>, transform_indices = @transform_4, window_bounds = array<i64: 9, 1, 128>}, {pipeline_mode = #tpu.pipeline_mode<synchronous>, transform_indices = @transform_5, window_bounds = array<i64: 1, 128>}, {pipeline_mode = #tpu.pipeline_mode<synchronous>, transform_indices = @transform_6, window_bounds = array<i64: 128, 128>}, {pipeline_mode = #tpu.pipeline_mode<synchronous>, transform_indices = @transform_7, window_bounds = array<i64: 1, 128>}, {transform_indices = @transform_8, window_bounds = array<i64: 2, 64, 128>}]} {
    %c0 = arith.constant 0 : index
    %c0_0 = arith.constant 0 : index
    %c0_1 = arith.constant 0 : index
    %0 = vector.load %arg1[%c0, %c0_0, %c0_1] : memref<2x576x4xbf16, #tpu.memory_space<vmem>>, vector<2x576x4xbf16>
    %1 = vector.shape_cast %0 : vector<2x576x4xbf16> to vector<1152x4xbf16>
    %c0_2 = arith.constant 0 : index
    %c0_3 = arith.constant 0 : index
    %2 = vector.load %arg3[%c0_2, %c0_3] : memref<4x128xbf16, #tpu.memory_space<vmem>>, vector<4x128xbf16>
    %cst = arith.constant dense<0.000000e+00> : vector<1152x128xf32>
    %3 = tpu.matmul %1, %2, %cst {dimension_numbers = #tpu.dot_dimension_numbers<[1], [0], [0], [1], [0, 0, 1, 1], [], []>} : vector<1152x4xbf16>, vector<4x128xbf16>, vector<1152x128xf32> -> vector<1152x128xf32>
    %c0_4 = arith.constant 0 : index
    %c0_5 = arith.constant 0 : index
    %4 = vector.load %arg4[%c0_4, %c0_5] : memref<1x128xf32, #tpu.memory_space<vmem>>, vector<1x128xf32>
    %5 = vector.broadcast %4 : vector<1x128xf32> to vector<1152x128xf32>
    %6 = arith.addf %3, %5 : vector<1152x128xf32>
    %cst_6 = arith.constant 0.000000e+00 : f32
    %cst_7 = arith.constant 6.000000e+00 : f32
    %7 = vector.broadcast %cst_6 : f32 to vector<1152x128xf32>
    %8 = arith.maximumf %7, %6 : vector<1152x128xf32>
    %9 = vector.broadcast %cst_7 : f32 to vector<1152x128xf32>
    %10 = arith.minimumf %9, %8 : vector<1152x128xf32>
    %11 = vector.shape_cast %10 : vector<1152x128xf32> to vector<2x36x16x128xf32>
    %c0_8 = arith.constant 0 : index
    %c0_9 = arith.constant 0 : index
    %c0_10 = arith.constant 0 : index
    %12 = vector.load %arg2[%c0_8, %c0_9, %c0_10] : memref<36x16x1xf32, #tpu.memory_space<vmem>>, vector<36x16x1xf32>
    %13 = vector.shape_cast %12 : vector<36x16x1xf32> to vector<1x36x16x1xf32>
    %14 = vector.broadcast %13 : vector<1x36x16x1xf32> to vector<2x36x16x128xf32>
    %15 = arith.mulf %11, %14 : vector<2x36x16x128xf32>
    %16 = vector.extract_strided_slice %15 {offsets = [0, 0, 0, 0], sizes = [2, 9, 16, 128], strides = [1, 1, 1, 1]} : vector<2x36x16x128xf32> to vector<2x9x16x128xf32>
    %17 = vector.extract_strided_slice %15 {offsets = [0, 9, 0, 0], sizes = [2, 9, 16, 128], strides = [1, 1, 1, 1]} : vector<2x36x16x128xf32> to vector<2x9x16x128xf32>
    %18 = vector.extract_strided_slice %15 {offsets = [0, 18, 0, 0], sizes = [2, 9, 16, 128], strides = [1, 1, 1, 1]} : vector<2x36x16x128xf32> to vector<2x9x16x128xf32>
    %19 = vector.extract_strided_slice %15 {offsets = [0, 27, 0, 0], sizes = [2, 9, 16, 128], strides = [1, 1, 1, 1]} : vector<2x36x16x128xf32> to vector<2x9x16x128xf32>
    %20 = vector.extract_strided_slice %16 {offsets = [0, 0, 1, 0], sizes = [2, 8, 8, 128], strides = [1, 1, 1, 1]} : vector<2x9x16x128xf32> to vector<2x8x8x128xf32>
    %21 = vector.extract_strided_slice %16 {offsets = [0, 1, 1, 0], sizes = [2, 8, 8, 128], strides = [1, 1, 1, 1]} : vector<2x9x16x128xf32> to vector<2x8x8x128xf32>
    %22 = vector.extract_strided_slice %18 {offsets = [0, 0, 1, 0], sizes = [2, 8, 8, 128], strides = [1, 1, 1, 1]} : vector<2x9x16x128xf32> to vector<2x8x8x128xf32>
    %c0_11 = arith.constant 0 : index
    %c0_12 = arith.constant 0 : index
    %c0_13 = arith.constant 0 : index
    %23 = vector.load %arg5[%c0_11, %c0_12, %c0_13] : memref<9x1x128xf32, #tpu.memory_space<vmem>>, vector<9x1x128xf32>
    %24 = vector.extract_strided_slice %16 {offsets = [0, 0, 0, 0], sizes = [2, 8, 8, 128], strides = [1, 1, 1, 1]} : vector<2x9x16x128xf32> to vector<2x8x8x128xf32>
    %25 = vector.extract_strided_slice %23 {offsets = [0, 0, 0], sizes = [1, 1, 128], strides = [1, 1, 1]} : vector<9x1x128xf32> to vector<1x1x128xf32>
    %26 = vector.shape_cast %25 : vector<1x1x128xf32> to vector<1x128xf32>
    %27 = vector.shape_cast %26 : vector<1x128xf32> to vector<1x1x1x128xf32>
    %28 = vector.broadcast %27 : vector<1x1x1x128xf32> to vector<2x8x8x128xf32>
    %29 = arith.mulf %24, %28 : vector<2x8x8x128xf32>
    %30 = vector.extract_strided_slice %17 {offsets = [0, 0, 0, 0], sizes = [2, 8, 8, 128], strides = [1, 1, 1, 1]} : vector<2x9x16x128xf32> to vector<2x8x8x128xf32>
    %31 = vector.extract_strided_slice %23 {offsets = [1, 0, 0], sizes = [1, 1, 128], strides = [1, 1, 1]} : vector<9x1x128xf32> to vector<1x1x128xf32>
    %32 = vector.shape_cast %31 : vector<1x1x128xf32> to vector<1x128xf32>
    %33 = vector.shape_cast %32 : vector<1x128xf32> to vector<1x1x1x128xf32>
    %34 = vector.broadcast %33 : vector<1x1x1x128xf32> to vector<2x8x8x128xf32>
    %35 = arith.mulf %30, %34 : vector<2x8x8x128xf32>
    %36 = arith.addf %29, %35 : vector<2x8x8x128xf32>
    %37 = vector.extract_strided_slice %23 {offsets = [2, 0, 0], sizes = [1, 1, 128], strides = [1, 1, 1]} : vector<9x1x128xf32> to vector<1x1x128xf32>
    %38 = vector.shape_cast %37 : vector<1x1x128xf32> to vector<1x128xf32>
    %39 = vector.shape_cast %38 : vector<1x128xf32> to vector<1x1x1x128xf32>
    %40 = vector.broadcast %39 : vector<1x1x1x128xf32> to vector<2x8x8x128xf32>
    %41 = arith.mulf %20, %40 : vector<2x8x8x128xf32>
    %42 = arith.addf %36, %41 : vector<2x8x8x128xf32>
    %43 = vector.extract_strided_slice %18 {offsets = [0, 0, 0, 0], sizes = [2, 8, 8, 128], strides = [1, 1, 1, 1]} : vector<2x9x16x128xf32> to vector<2x8x8x128xf32>
    %44 = vector.extract_strided_slice %23 {offsets = [3, 0, 0], sizes = [1, 1, 128], strides = [1, 1, 1]} : vector<9x1x128xf32> to vector<1x1x128xf32>
    %45 = vector.shape_cast %44 : vector<1x1x128xf32> to vector<1x128xf32>
    %46 = vector.shape_cast %45 : vector<1x128xf32> to vector<1x1x1x128xf32>
    %47 = vector.broadcast %46 : vector<1x1x1x128xf32> to vector<2x8x8x128xf32>
    %48 = arith.mulf %43, %47 : vector<2x8x8x128xf32>
    %49 = arith.addf %42, %48 : vector<2x8x8x128xf32>
    %50 = vector.extract_strided_slice %19 {offsets = [0, 0, 0, 0], sizes = [2, 8, 8, 128], strides = [1, 1, 1, 1]} : vector<2x9x16x128xf32> to vector<2x8x8x128xf32>
    %51 = vector.extract_strided_slice %23 {offsets = [4, 0, 0], sizes = [1, 1, 128], strides = [1, 1, 1]} : vector<9x1x128xf32> to vector<1x1x128xf32>
    %52 = vector.shape_cast %51 : vector<1x1x128xf32> to vector<1x128xf32>
    %53 = vector.shape_cast %52 : vector<1x128xf32> to vector<1x1x1x128xf32>
    %54 = vector.broadcast %53 : vector<1x1x1x128xf32> to vector<2x8x8x128xf32>
    %55 = arith.mulf %50, %54 : vector<2x8x8x128xf32>
    %56 = arith.addf %49, %55 : vector<2x8x8x128xf32>
    %57 = vector.extract_strided_slice %23 {offsets = [5, 0, 0], sizes = [1, 1, 128], strides = [1, 1, 1]} : vector<9x1x128xf32> to vector<1x1x128xf32>
    %58 = vector.shape_cast %57 : vector<1x1x128xf32> to vector<1x128xf32>
    %59 = vector.shape_cast %58 : vector<1x128xf32> to vector<1x1x1x128xf32>
    %60 = vector.broadcast %59 : vector<1x1x1x128xf32> to vector<2x8x8x128xf32>
    %61 = arith.mulf %22, %60 : vector<2x8x8x128xf32>
    %62 = arith.addf %56, %61 : vector<2x8x8x128xf32>
    %63 = vector.extract_strided_slice %16 {offsets = [0, 1, 0, 0], sizes = [2, 8, 8, 128], strides = [1, 1, 1, 1]} : vector<2x9x16x128xf32> to vector<2x8x8x128xf32>
    %64 = vector.extract_strided_slice %23 {offsets = [6, 0, 0], sizes = [1, 1, 128], strides = [1, 1, 1]} : vector<9x1x128xf32> to vector<1x1x128xf32>
    %65 = vector.shape_cast %64 : vector<1x1x128xf32> to vector<1x128xf32>
    %66 = vector.shape_cast %65 : vector<1x128xf32> to vector<1x1x1x128xf32>
    %67 = vector.broadcast %66 : vector<1x1x1x128xf32> to vector<2x8x8x128xf32>
    %68 = arith.mulf %63, %67 : vector<2x8x8x128xf32>
    %69 = arith.addf %62, %68 : vector<2x8x8x128xf32>
    %70 = vector.extract_strided_slice %17 {offsets = [0, 1, 0, 0], sizes = [2, 8, 8, 128], strides = [1, 1, 1, 1]} : vector<2x9x16x128xf32> to vector<2x8x8x128xf32>
    %71 = vector.extract_strided_slice %23 {offsets = [7, 0, 0], sizes = [1, 1, 128], strides = [1, 1, 1]} : vector<9x1x128xf32> to vector<1x1x128xf32>
    %72 = vector.shape_cast %71 : vector<1x1x128xf32> to vector<1x128xf32>
    %73 = vector.shape_cast %72 : vector<1x128xf32> to vector<1x1x1x128xf32>
    %74 = vector.broadcast %73 : vector<1x1x1x128xf32> to vector<2x8x8x128xf32>
    %75 = arith.mulf %70, %74 : vector<2x8x8x128xf32>
    %76 = arith.addf %69, %75 : vector<2x8x8x128xf32>
    %77 = vector.extract_strided_slice %23 {offsets = [8, 0, 0], sizes = [1, 1, 128], strides = [1, 1, 1]} : vector<9x1x128xf32> to vector<1x1x128xf32>
    %78 = vector.shape_cast %77 : vector<1x1x128xf32> to vector<1x128xf32>
    %79 = vector.shape_cast %78 : vector<1x128xf32> to vector<1x1x1x128xf32>
    %80 = vector.broadcast %79 : vector<1x1x1x128xf32> to vector<2x8x8x128xf32>
    %81 = arith.mulf %21, %80 : vector<2x8x8x128xf32>
    %82 = arith.addf %76, %81 : vector<2x8x8x128xf32>
    %c0_14 = arith.constant 0 : index
    %c0_15 = arith.constant 0 : index
    %83 = vector.load %arg6[%c0_14, %c0_15] : memref<1x128xf32, #tpu.memory_space<vmem>>, vector<1x128xf32>
    %84 = vector.shape_cast %83 : vector<1x128xf32> to vector<1x1x1x128xf32>
    %85 = vector.broadcast %84 : vector<1x1x1x128xf32> to vector<2x8x8x128xf32>
    %86 = arith.addf %82, %85 : vector<2x8x8x128xf32>
    %cst_16 = arith.constant 0.000000e+00 : f32
    %cst_17 = arith.constant 6.000000e+00 : f32
    %87 = vector.broadcast %cst_16 : f32 to vector<2x8x8x128xf32>
    %88 = arith.maximumf %87, %86 : vector<2x8x8x128xf32>
    %89 = vector.broadcast %cst_17 : f32 to vector<2x8x8x128xf32>
    %90 = arith.minimumf %89, %88 : vector<2x8x8x128xf32>
    %91 = vector.shape_cast %90 : vector<2x8x8x128xf32> to vector<128x128xf32>
    %92 = arith.truncf %91 : vector<128x128xf32> to vector<128x128xbf16>
    %c0_18 = arith.constant 0 : index
    %c0_19 = arith.constant 0 : index
    %93 = vector.load %arg7[%c0_18, %c0_19] : memref<128x128xbf16, #tpu.memory_space<vmem>>, vector<128x128xbf16>
    %cst_20 = arith.constant dense<0.000000e+00> : vector<128x128xf32>
    %94 = tpu.matmul %92, %93, %cst_20 {dimension_numbers = #tpu.dot_dimension_numbers<[1], [0], [0], [1], [0, 0, 1, 1], [], []>} : vector<128x128xbf16>, vector<128x128xbf16>, vector<128x128xf32> -> vector<128x128xf32>
    %c0_21 = arith.constant 0 : index
    %c0_22 = arith.constant 0 : index
    %95 = vector.load %arg8[%c0_21, %c0_22] : memref<1x128xf32, #tpu.memory_space<vmem>>, vector<1x128xf32>
    %96 = vector.broadcast %95 : vector<1x128xf32> to vector<128x128xf32>
    %97 = arith.addf %94, %96 : vector<128x128xf32>
    %cst_23 = arith.constant 0.000000e+00 : f32
    %cst_24 = arith.constant 6.000000e+00 : f32
    %98 = vector.broadcast %cst_23 : f32 to vector<128x128xf32>
    %99 = arith.maximumf %98, %97 : vector<128x128xf32>
    %100 = vector.broadcast %cst_24 : f32 to vector<128x128xf32>
    %101 = arith.minimumf %100, %99 : vector<128x128xf32>
    %102 = vector.shape_cast %101 : vector<128x128xf32> to vector<2x64x128xf32>
    %c0_25 = arith.constant 0 : index
    %c0_26 = arith.constant 0 : index
    %c0_27 = arith.constant 0 : index
    %103 = vector.load %arg9[%c0_25, %c0_26, %c0_27] : memref<2x64x128xf32, #tpu.memory_space<vmem>>, vector<2x64x128xf32>
    tpu.vector_store %arg9[%c0_25, %c0_26, %c0_27], %102 {strides = array<i32>} : memref<2x64x128xf32, #tpu.memory_space<vmem>>, vector<2x64x128xf32>,
    return
  }
  func.func @transform_0(%arg0: i32) -> (i32, i32, i32) {
    %c0_i32 = arith.constant 0 : i32
    %c0_i32_0 = arith.constant 0 : i32
    %c0_i32_1 = arith.constant 0 : i32
    return %arg0, %c0_i32, %c0_i32_0 : i32, i32, i32
  }
  func.func @transform_1(%arg0: i32) -> (i32, i32, i32) {
    %c0_i32 = arith.constant 0 : i32
    %c0_i32_0 = arith.constant 0 : i32
    %c0_i32_1 = arith.constant 0 : i32
    %c0_i32_2 = arith.constant 0 : i32
    return %c0_i32, %c0_i32_0, %c0_i32_1 : i32, i32, i32
  }
  func.func @transform_2(%arg0: i32) -> (i32, i32) {
    %c0_i32 = arith.constant 0 : i32
    %c0_i32_0 = arith.constant 0 : i32
    %c0_i32_1 = arith.constant 0 : i32
    return %c0_i32, %c0_i32_0 : i32, i32
  }
  func.func @transform_3(%arg0: i32) -> (i32, i32) {
    %c0_i32 = arith.constant 0 : i32
    %c0_i32_0 = arith.constant 0 : i32
    %c0_i32_1 = arith.constant 0 : i32
    return %c0_i32, %c0_i32_0 : i32, i32
  }
  func.func @transform_4(%arg0: i32) -> (i32, i32, i32) {
    %c0_i32 = arith.constant 0 : i32
    %c0_i32_0 = arith.constant 0 : i32
    %c0_i32_1 = arith.constant 0 : i32
    %c0_i32_2 = arith.constant 0 : i32
    return %c0_i32, %c0_i32_0, %c0_i32_1 : i32, i32, i32
  }
  func.func @transform_5(%arg0: i32) -> (i32, i32) {
    %c0_i32 = arith.constant 0 : i32
    %c0_i32_0 = arith.constant 0 : i32
    %c0_i32_1 = arith.constant 0 : i32
    return %c0_i32, %c0_i32_0 : i32, i32
  }
  func.func @transform_6(%arg0: i32) -> (i32, i32) {
    %c0_i32 = arith.constant 0 : i32
    %c0_i32_0 = arith.constant 0 : i32
    %c0_i32_1 = arith.constant 0 : i32
    return %c0_i32, %c0_i32_0 : i32, i32
  }
  func.func @transform_7(%arg0: i32) -> (i32, i32) {
    %c0_i32 = arith.constant 0 : i32
    %c0_i32_0 = arith.constant 0 : i32
    %c0_i32_1 = arith.constant 0 : i32
    return %c0_i32, %c0_i32_0 : i32, i32
  }
  func.func @transform_8(%arg0: i32) -> (i32, i32, i32) {
    %c0_i32 = arith.constant 0 : i32
    %c0_i32_0 = arith.constant 0 : i32
    %c0_i32_1 = arith.constant 0 : i32
    return %arg0, %c0_i32, %c0_i32_0 : i32, i32, i32
  }
}

</mosaic_0001>

<llo_original>
// kernel: tpu_custom_call.1
$region0: #{tpu_custom_call.1}
  #allocation0 [shape = 'u32[]', space=smem, size = 0x4, offset = 0x4, fixed_abs, tag = 'smem constant byte address 0x4 - core index']
  #allocation1 [shape = 'u32[144,128]{1,0:T(1,128)}', space=vmem, size = 0x12000, scoped, tag = 'internal scratch']
  %s0 = inlined_call_operand.hbm [shape: f32[1,2,16,128], index: 0, kind: input, shape index: {}]
  %s1 = inlined_call_operand.hbm [shape: f32[1,2,16,128], index: 1, kind: output, shape index: {}]
  %s2 = sld [smem:[#allocation0]]
  $region18: #{tpu_custom_call.1} parent=0
    _
  %s4 = ssub.s32 1, %s2
  %s5 = scalar_select 0, %s4, %s2
  $region1: #{tpu_custom_call.1} parent=0
    #allocation2 [shape = 'u8[16384]{0}', space=vmem, size = 0x4000, scoped, tag = 'input window, operand 0, single buffered']
    #allocation3 [shape = 's32[1]{0}', space=sflag, size = 0x4, scoped, tag = 'scoped memory for tpu_custom_call.1']
    #allocation4 [shape = 's32[1]{0}', space=sflag, size = 0x4, scoped, tag = 'scoped memory for tpu_custom_call.1']
    #allocation5 [shape = 'u8[16384]{0}', space=vmem, size = 0x4000, scoped, tag = 'output window, operand 0, single buffered']
    %6 = vsyncpa [#allocation3], 0
    %7 = vsyncpa [#allocation4], 0
    // Predicated region
    $region2: #{tpu_custom_call.1} parent=1 // pred_check
      _
    $region3: #{tpu_custom_call.1} parent=1 // pred_check_branch
      %9 = sbr.rel (0) target = $region5
    $region4: #{tpu_custom_call.1} parent=1 // pred_region
      %s11 = ssub.s32 512, 512
      %12 = vsyncadd [#allocation3], %s11
      %s13 = sshll.u32 [#allocation2], 4
      %s14 = int_to_ptr.vmem [resolvable:$true] %s13
      %19 = dma.hbm_to_vmem [thread:$0]  %s0, 512, %s14, [#allocation3], 128, 128, 8
    $region5: #{tpu_custom_call.1} parent=1 // pred_fallthru
      _
    // Predicated region
    $region6: #{tpu_custom_call.1} parent=1 // pred_check
      _
    $region7: #{tpu_custom_call.1} parent=1 // pred_check_branch
      %21 = sbr.rel (0) target = $region9
    $region8: #{tpu_custom_call.1} parent=1 // pred_region
      %22 = dma.done [#allocation3], 512
    $region9: #{tpu_custom_call.1} parent=1 // pred_fallthru
      _
    %v23 = vld [vmem:[#allocation2] sm:$0xff]
    %v24 = vld [vmem:[#allocation2 + $0x8] sm:$0xff]
    %v25 = vld [vmem:[#allocation2 + $0x10] sm:$0xff]
    %v26 = vld [vmem:[#allocation2 + $0x18] sm:$0xff]
    %v27 = vrot.slane %v23, 7
    %v28 = vrot.slane %v25, 7
    %v29 = vrot.slane %v24, 7
    %v30 = vrot.slane %v26, 7
    %v31 = vlaneseq
    %v32 = vshrl.u32 %v31, 7
    %vm33 = vcmp.lt.s32.totalorder %v32, 1
    %v34 = vsel %vm33, %v27, %v29
    %v35 = vsel %vm33, %v28, %v30
    %v36 = vsel %vm33, %v29, %v27
    %v37 = vsel %vm33, %v30, %v28
    %38 = vst [vmem:[#allocation5] sm:$0xff] %v36
    %39 = vst [vmem:[#allocation5 + $0x8] sm:$0xff] %v34
    %40 = vst [vmem:[#allocation5 + $0x10] sm:$0xff] %v37
    %41 = vst [vmem:[#allocation5 + $0x18] sm:$0xff] %v35
    // Predicated region
    $region10: #{tpu_custom_call.1} parent=1 // pred_check
      _
    $region11: #{tpu_custom_call.1} parent=1 // pred_check_branch
      %43 = sbr.rel (0) target = $region13
    $region12: #{tpu_custom_call.1} parent=1 // pred_region
      %s45 = ssub.s32 512, 512
      %46 = vsyncadd [#allocation4], %s45
      %s47 = sshll.u32 [#allocation5], 4
      %s48 = int_to_ptr.vmem [resolvable:$true] %s47
      %53 = dma.vmem_to_hbm [thread:$0]  %s48, 512, %s1, [#allocation4], 128, 128, 8
    $region13: #{tpu_custom_call.1} parent=1 // pred_fallthru
      _
    // Predicated region
    $region14: #{tpu_custom_call.1} parent=1 // pred_check
      _
    $region15: #{tpu_custom_call.1} parent=1 // pred_check_branch
      %55 = sbr.rel (0) target = $region17
    $region16: #{tpu_custom_call.1} parent=1 // pred_region
      %56 = dma.done [#allocation4], 512
    $region17: #{tpu_custom_call.1} parent=1 // pred_fallthru
      _
    %57 = vsyncpa [#allocation3], 1
    %58 = vsyncpa [#allocation4], 1

// kernel: inverted_residual_extra.1
$region0: #{inverted_residual_extra.1}
  #allocation0 [shape = 'u32[]', space=smem, size = 0x4, offset = 0x4, fixed_abs, tag = 'smem constant byte address 0x4 - core index']
  #allocation1 [shape = 'u32[144,128]{1,0:T(1,128)}', space=vmem, size = 0x12000, scoped, tag = 'internal scratch']
  %s0 = inlined_call_operand.vmem [shape: bf16[2,576,4], index: 0, kind: input, shape index: {}]
  %s1 = inlined_call_operand.vmem [shape: f32[36,16,1], index: 1, kind: input, shape index: {}]
  %s2 = inlined_call_operand.vmem [shape: bf16[4,128], index: 2, kind: input, shape index: {}]
  %s3 = inlined_call_operand.vmem [shape: f32[1,128], index: 3, kind: input, shape index: {}]
  %s4 = inlined_call_operand.vmem [shape: f32[9,1,128], index: 4, kind: input, shape index: {}]
  %s5 = inlined_call_operand.vmem [shape: f32[1,128], index: 5, kind: input, shape index: {}]
  %s6 = inlined_call_operand.vmem [shape: bf16[128,128], index: 6, kind: input, shape index: {}]
  %s7 = inlined_call_operand.vmem [shape: f32[1,128], index: 7, kind: input, shape index: {}]
  %s8 = inlined_call_operand.vmem [shape: f32[2,64,128], index: 8, kind: output, shape index: {}]
  %s9 = sld [smem:[#allocation0]]
  $region42: #{inverted_residual_extra.1} parent=0
    _
  %s11 = ssub.s32 1, %s9
  %s12 = scalar_select 0, %s11, %s9
  // Predicated region
  $region2: #{inverted_residual_extra.1} parent=0 // pred_check
    _
  $region3: #{inverted_residual_extra.1} parent=0 // pred_check_branch
    %14 = sbr.rel (0) target = $region5
  $region4: #{inverted_residual_extra.1} parent=0 // pred_region
    _
  $region5: #{inverted_residual_extra.1} parent=0 // pred_fallthru
    _
  // Predicated region
  $region6: #{inverted_residual_extra.1} parent=0 // pred_check
    _
  $region7: #{inverted_residual_extra.1} parent=0 // pred_check_branch
    %16 = sbr.rel (0) target = $region9
  $region8: #{inverted_residual_extra.1} parent=0 // pred_region
    _
  $region9: #{inverted_residual_extra.1} parent=0 // pred_fallthru
    _
  // Predicated region
  $region10: #{inverted_residual_extra.1} parent=0 // pred_check
    _
  $region11: #{inverted_residual_extra.1} parent=0 // pred_check_branch
    %18 = sbr.rel (0) target = $region13
  $region12: #{inverted_residual_extra.1} parent=0 // pred_region
    _
  $region13: #{inverted_residual_extra.1} parent=0 // pred_fallthru
    _
  // Predicated region
  $region14: #{inverted_residual_extra.1} parent=0 // pred_check
    _
  $region15: #{inverted_residual_extra.1} parent=0 // pred_check_branch
    %20 = sbr.rel (0) target = $region17
  $region16: #{inverted_residual_extra.1} parent=0 // pred_region
    _
  $region17: #{inverted_residual_extra.1} parent=0 // pred_fallthru
    _
  // Predicated region
  $region18: #{inverted_residual_extra.1} parent=0 // pred_check
    _
  $region19: #{inverted_residual_extra.1} parent=0 // pred_check_branch
    %22 = sbr.rel (0) target = $region21
  $region20: #{inverted_residual_extra.1} parent=0 // pred_region
    _
  $region21: #{inverted_residual_extra.1} parent=0 // pred_fallthru
    _
  // Predicated region
  $region22: #{inverted_residual_extra.1} parent=0 // pred_check
    _
  $region23: #{inverted_residual_extra.1} parent=0 // pred_check_branch
    %24 = sbr.rel (0) target = $region25
  $region24: #{inverted_residual_extra.1} parent=0 // pred_region
    _
  $region25: #{inverted_residual_extra.1} parent=0 // pred_fallthru
    _
  // Predicated region
  $region26: #{inverted_residual_extra.1} parent=0 // pred_check
    _
  $region27: #{inverted_residual_extra.1} parent=0 // pred_check_branch
    %26 = sbr.rel (0) target = $region29
  $region28: #{inverted_residual_extra.1} parent=0 // pred_region
    _
  $region29: #{inverted_residual_extra.1} parent=0 // pred_fallthru
    _
  // Predicated region
  $region30: #{inverted_residual_extra.1} parent=0 // pred_check
    _
  $region31: #{inverted_residual_extra.1} parent=0 // pred_check_branch
    %28 = sbr.rel (0) target = $region33
  $region32: #{inverted_residual_extra.1} parent=0 // pred_region
    _
  $region33: #{inverted_residual_extra.1} parent=0 // pred_fallthru
    _
  %v30 = vld [vmem:[%s0] sm:$0xf]
  %v31 = vld [vmem:[%s0 + $0x4] sm:$0xf]
  %v32 = vld [vmem:[%s0 + $0x8] sm:$0xf]
  %v33 = vld [vmem:[%s0 + $0xc] sm:$0xf]
  %v34 = vld [vmem:[%s0 + $0x10] sm:$0xf]
  %v35 = vld [vmem:[%s0 + $0x14] sm:$0xf]
  %v36 = vld [vmem:[%s0 + $0x18] sm:$0xf]
  %v37 = vld [vmem:[%s0 + $0x1c] sm:$0xf]
  %v38 = vld [vmem:[%s0 + $0x20] sm:$0xf]
  %v39 = vld [vmem:[%s0 + $0x24] sm:$0xf]
  %v40 = vld [vmem:[%s0 + $0x28] sm:$0xf]
  %v41 = vld [vmem:[%s0 + $0x2c] sm:$0xf]
  %v42 = vld [vmem:[%s0 + $0x30] sm:$0xf]
  %v43 = vld [vmem:[%s0 + $0x34] sm:$0xf]
  %v44 = vld [vmem:[%s0 + $0x38] sm:$0xf]
  %v45 = vld [vmem:[%s0 + $0x3c] sm:$0xf]
  %v46 = vld [vmem:[%s0 + $0x40] sm:$0xf]
  %v47 = vld [vmem:[%s0 + $0x44] sm:$0xf]
  %v48 = vld [vmem:[%s0 + $0x48] sm:$0xf]
  %v49 = vld [vmem:[%s0 + $0x4c] sm:$0xf]
  %v50 = vld [vmem:[%s0 + $0x50] sm:$0xf]
  %v51 = vld [vmem:[%s0 + $0x54] sm:$0xf]
  %v52 = vld [vmem:[%s0 + $0x58] sm:$0xf]
  %v53 = vld [vmem:[%s0 + $0x5c] sm:$0xf]
  %v54 = vld [vmem:[%s0 + $0x60] sm:$0xf]
  %v55 = vld [vmem:[%s0 + $0x64] sm:$0xf]
  %v56 = vld [vmem:[%s0 + $0x68] sm:$0xf]
  %v57 = vld [vmem:[%s0 + $0x6c] sm:$0xf]
  %v58 = vld [vmem:[%s0 + $0x70] sm:$0xf]
  %v59 = vld [vmem:[%s0 + $0x74] sm:$0xf]
  %v60 = vld [vmem:[%s0 + $0x78] sm:$0xf]
  %v61 = vld [vmem:[%s0 + $0x7c] sm:$0xf]
  %v62 = vld [vmem:[%s0 + $0x80] sm:$0xf]
  %v63 = vld [vmem:[%s0 + $0x84] sm:$0xf]
  %v64 = vld [vmem:[%s0 + $0x88] sm:$0xf]
  %v65 = vld [vmem:[%s0 + $0x8c] sm:$0xf]
  %v66 = vld [vmem:[%s0 + $0x90] sm:$0xf]
  %v67 = vld [vmem:[%s0 + $0x94] sm:$0xf]
  %v68 = vld [vmem:[%s0 + $0x98] sm:$0xf]
  %v69 = vld [vmem:[%s0 + $0x9c] sm:$0xf]
  %v70 = vld [vmem:[%s0 + $0xa0] sm:$0xf]
  %v71 = vld [vmem:[%s0 + $0xa4] sm:$0xf]
  %v72 = vld [vmem:[%s0 + $0xa8] sm:$0xf]
  %v73 = vld [vmem:[%s0 + $0xac] sm:$0xf]
  %v74 = vld [vmem:[%s0 + $0xb0] sm:$0xf]
  %v75 = vld [vmem:[%s0 + $0xb4] sm:$0xf]
  %v76 = vld [vmem:[%s0 + $0xb8] sm:$0xf]
  %v77 = vld [vmem:[%s0 + $0xbc] sm:$0xf]
  %v78 = vld [vmem:[%s0 + $0xc0] sm:$0xf]
  %v79 = vld [vmem:[%s0 + $0xc4] sm:$0xf]
  %v80 = vld [vmem:[%s0 + $0xc8] sm:$0xf]
  %v81 = vld [vmem:[%s0 + $0xcc] sm:$0xf]
  %v82 = vld [vmem:[%s0 + $0xd0] sm:$0xf]
  %v83 = vld [vmem:[%s0 + $0xd4] sm:$0xf]
  %v84 = vld [vmem:[%s0 + $0xd8] sm:$0xf]
  %v85 = vld [vmem:[%s0 + $0xdc] sm:$0xf]
  %v86 = vld [vmem:[%s0 + $0xe0] sm:$0xf]
  %v87 = vld [vmem:[%s0 + $0xe4] sm:$0xf]
  %v88 = vld [vmem:[%s0 + $0xe8] sm:$0xf]
  %v89 = vld [vmem:[%s0 + $0xec] sm:$0xf]
  %v90 = vld [vmem:[%s0 + $0xf0] sm:$0xf]
  %v91 = vld [vmem:[%s0 + $0xf4] sm:$0xf]
  %v92 = vld [vmem:[%s0 + $0xf8] sm:$0xf]
  %v93 = vld [vmem:[%s0 + $0xfc] sm:$0xf]
  %v94 = vld [vmem:[%s0 + $0x100] sm:$0xf]
  %v95 = vld [vmem:[%s0 + $0x104] sm:$0xf]
  %v96 = vld [vmem:[%s0 + $0x108] sm:$0xf]
  %v97 = vld [vmem:[%s0 + $0x10c] sm:$0xf]
  %v98 = vld [vmem:[%s0 + $0x110] sm:$0xf]
  %v99 = vld [vmem:[%s0 + $0x114] sm:$0xf]
  %v100 = vld [vmem:[%s0 + $0x118] sm:$0xf]
  %v101 = vld [vmem:[%s0 + $0x11c] sm:$0xf]
  %v102 = vld [vmem:[%s0 + $0x120] sm:$0xf]
  %v103 = vld [vmem:[%s0 + $0x124] sm:$0xf]
  %v104 = vld [vmem:[%s0 + $0x128] sm:$0xf]
  %v105 = vld [vmem:[%s0 + $0x12c] sm:$0xf]
  %v106 = vld [vmem:[%s0 + $0x130] sm:$0xf]
  %v107 = vld [vmem:[%s0 + $0x134] sm:$0xf]
  %v108 = vld [vmem:[%s0 + $0x138] sm:$0xf]
  %v109 = vld [vmem:[%s0 + $0x13c] sm:$0xf]
  %v110 = vld [vmem:[%s0 + $0x140] sm:$0xf]
  %v111 = vld [vmem:[%s0 + $0x144] sm:$0xf]
  %v112 = vld [vmem:[%s0 + $0x148] sm:$0xf]
  %v113 = vld [vmem:[%s0 + $0x14c] sm:$0xf]
  %v114 = vld [vmem:[%s0 + $0x150] sm:$0xf]
  %v115 = vld [vmem:[%s0 + $0x154] sm:$0xf]
  %v116 = vld [vmem:[%s0 + $0x158] sm:$0xf]
  %v117 = vld [vmem:[%s0 + $0x15c] sm:$0xf]
  %v118 = vld [vmem:[%s0 + $0x160] sm:$0xf]
  %v119 = vld [vmem:[%s0 + $0x164] sm:$0xf]
  %v120 = vld [vmem:[%s0 + $0x168] sm:$0xf]
  %v121 = vld [vmem:[%s0 + $0x16c] sm:$0xf]
  %v122 = vld [vmem:[%s0 + $0x170] sm:$0xf]
  %v123 = vld [vmem:[%s0 + $0x174] sm:$0xf]
  %v124 = vld [vmem:[%s0 + $0x178] sm:$0xf]
  %v125 = vld [vmem:[%s0 + $0x17c] sm:$0xf]
  %v126 = vld [vmem:[%s0 + $0x180] sm:$0xf]
  %v127 = vld [vmem:[%s0 + $0x184] sm:$0xf]
  %v128 = vld [vmem:[%s0 + $0x188] sm:$0xf]
  %v129 = vld [vmem:[%s0 + $0x18c] sm:$0xf]
  %v130 = vld [vmem:[%s0 + $0x190] sm:$0xf]
  %v131 = vld [vmem:[%s0 + $0x194] sm:$0xf]
  %v132 = vld [vmem:[%s0 + $0x198] sm:$0xf]
  %v133 = vld [vmem:[%s0 + $0x19c] sm:$0xf]
  %v134 = vld [vmem:[%s0 + $0x1a0] sm:$0xf]
  %v135 = vld [vmem:[%s0 + $0x1a4] sm:$0xf]
  %v136 = vld [vmem:[%s0 + $0x1a8] sm:$0xf]
  %v137 = vld [vmem:[%s0 + $0x1ac] sm:$0xf]
  %v138 = vld [vmem:[%s0 + $0x1b0] sm:$0xf]
  %v139 = vld [vmem:[%s0 + $0x1b4] sm:$0xf]
  %v140 = vld [vmem:[%s0 + $0x1b8] sm:$0xf]
  %v141 = vld [vmem:[%s0 + $0x1bc] sm:$0xf]
  %v142 = vld [vmem:[%s0 + $0x1c0] sm:$0xf]
  %v143 = vld [vmem:[%s0 + $0x1c4] sm:$0xf]
  %v144 = vld [vmem:[%s0 + $0x1c8] sm:$0xf]
  %v145 = vld [vmem:[%s0 + $0x1cc] sm:$0xf]
  %v146 = vld [vmem:[%s0 + $0x1d0] sm:$0xf]
  %v147 = vld [vmem:[%s0 + $0x1d4] sm:$0xf]
  %v148 = vld [vmem:[%s0 + $0x1d8] sm:$0xf]
  %v149 = vld [vmem:[%s0 + $0x1dc] sm:$0xf]
  %v150 = vld [vmem:[%s0 + $0x1e0] sm:$0xf]
  %v151 = vld [vmem:[%s0 + $0x1e4] sm:$0xf]
  %v152 = vld [vmem:[%s0 + $0x1e8] sm:$0xf]
  %v153 = vld [vmem:[%s0 + $0x1ec] sm:$0xf]
  %v154 = vld [vmem:[%s0 + $0x1f0] sm:$0xf]
  %v155 = vld [vmem:[%s0 + $0x1f4] sm:$0xf]
  %v156 = vld [vmem:[%s0 + $0x1f8] sm:$0xf]
  %v157 = vld [vmem:[%s0 + $0x1fc] sm:$0xf]
  %v158 = vld [vmem:[%s0 + $0x200] sm:$0xf]
  %v159 = vld [vmem:[%s0 + $0x204] sm:$0xf]
  %v160 = vld [vmem:[%s0 + $0x208] sm:$0xf]
  %v161 = vld [vmem:[%s0 + $0x20c] sm:$0xf]
  %v162 = vld [vmem:[%s0 + $0x210] sm:$0xf]
  %v163 = vld [vmem:[%s0 + $0x214] sm:$0xf]
  %v164 = vld [vmem:[%s0 + $0x218] sm:$0xf]
  %v165 = vld [vmem:[%s0 + $0x21c] sm:$0xf]
  %v166 = vld [vmem:[%s0 + $0x220] sm:$0xf]
  %v167 = vld [vmem:[%s0 + $0x224] sm:$0xf]
  %v168 = vld [vmem:[%s0 + $0x228] sm:$0xf]
  %v169 = vld [vmem:[%s0 + $0x22c] sm:$0xf]
  %v170 = vld [vmem:[%s0 + $0x230] sm:$0xf]
  %v171 = vld [vmem:[%s0 + $0x234] sm:$0xf]
  %v172 = vld [vmem:[%s0 + $0x238] sm:$0xf]
  %v173 = vld [vmem:[%s0 + $0x23c] sm:$0xf]
  %v174 = vld [vmem:[%s2] sm:$0x3]
  %v175 = vld [vmem:[%s3] sm:$0x1]
  %v177 = vlaneseq
  %v178 = vshrl.u32 %v177, 7
  %v179 = vsub.s32 0, %v178
  %v180 = vrot.slane %v175, %v179
  %v326 = vunpack.c.l.b16 %v30
  %v327 = vunpack.c.l.b16 %v31
  %v328 = vunpack.c.l.b16 %v32
  %v329 = vunpack.c.l.b16 %v33
  %v330 = vunpack.c.l.b16 %v34
  %v331 = vunpack.c.l.b16 %v35
  %v332 = vunpack.c.l.b16 %v36
  %v333 = vunpack.c.l.b16 %v37
  %v334 = vunpack.c.l.b16 %v38
  %v335 = vunpack.c.l.b16 %v39
  %v336 = vunpack.c.l.b16 %v40
  %v337 = vunpack.c.l.b16 %v41
  %v338 = vunpack.c.l.b16 %v42
  %v339 = vunpack.c.l.b16 %v43
  %v340 = vunpack.c.l.b16 %v44
  %v341 = vunpack.c.l.b16 %v45
  %v342 = vunpack.c.l.b16 %v46
  %v343 = vunpack.c.l.b16 %v47
  %v344 = vunpack.c.l.b16 %v48
  %v345 = vunpack.c.l.b16 %v49
  %v346 = vunpack.c.l.b16 %v50
  %v347 = vunpack.c.l.b16 %v51
  %v348 = vunpack.c.l.b16 %v52
  %v349 = vunpack.c.l.b16 %v53
  %v350 = vunpack.c.l.b16 %v54
  %v351 = vunpack.c.l.b16 %v55
  %v352 = vunpack.c.l.b16 %v56
  %v353 = vunpack.c.l.b16 %v57
  %v354 = vunpack.c.l.b16 %v58
  %v355 = vunpack.c.l.b16 %v59
  %v356 = vunpack.c.l.b16 %v60
  %v357 = vunpack.c.l.b16 %v61
  %v358 = vunpack.c.l.b16 %v62
  %v359 = vunpack.c.l.b16 %v63
  %v360 = vunpack.c.l.b16 %v64
  %v361 = vunpack.c.l.b16 %v65
  %v362 = vunpack.c.l.b16 %v66
  %v363 = vunpack.c.l.b16 %v67
  %v364 = vunpack.c.l.b16 %v68
  %v365 = vunpack.c.l.b16 %v69
  %v366 = vunpack.c.l.b16 %v70
  %v367 = vunpack.c.l.b16 %v71
  %v368 = vunpack.c.l.b16 %v72
  %v369 = vunpack.c.l.b16 %v73
  %v370 = vunpack.c.l.b16 %v74
  %v371 = vunpack.c.l.b16 %v75
  %v372 = vunpack.c.l.b16 %v76
  %v373 = vunpack.c.l.b16 %v77
  %v374 = vunpack.c.l.b16 %v78
  %v375 = vunpack.c.l.b16 %v79
  %v376 = vunpack.c.l.b16 %v80
  %v377 = vunpack.c.l.b16 %v81
  %v378 = vunpack.c.l.b16 %v82
  %v379 = vunpack.c.l.b16 %v83
  %v380 = vunpack.c.l.b16 %v84
  %v381 = vunpack.c.l.b16 %v85
  %v382 = vunpack.c.l.b16 %v86
  %v383 = vunpack.c.l.b16 %v87
  %v384 = vunpack.c.l.b16 %v88
  %v385 = vunpack.c.l.b16 %v89
  %v386 = vunpack.c.l.b16 %v90
  %v387 = vunpack.c.l.b16 %v91
  %v388 = vunpack.c.l.b16 %v92
  %v389 = vunpack.c.l.b16 %v93
  %v390 = vunpack.c.l.b16 %v94
  %v391 = vunpack.c.l.b16 %v95
  %v392 = vunpack.c.l.b16 %v96
  %v393 = vunpack.c.l.b16 %v97
  %v394 = vunpack.c.l.b16 %v98
  %v395 = vunpack.c.l.b16 %v99
  %v396 = vunpack.c.l.b16 %v100
  %v397 = vunpack.c.l.b16 %v101
  %v398 = vunpack.c.l.b16 %v102
  %v399 = vunpack.c.l.b16 %v103
  %v400 = vunpack.c.l.b16 %v104
  %v401 = vunpack.c.l.b16 %v105
  %v402 = vunpack.c.l.b16 %v106
  %v403 = vunpack.c.l.b16 %v107
  %v404 = vunpack.c.l.b16 %v108
  %v405 = vunpack.c.l.b16 %v109
  %v406 = vunpack.c.l.b16 %v110
  %v407 = vunpack.c.l.b16 %v111
  %v408 = vunpack.c.l.b16 %v112
  %v409 = vunpack.c.l.b16 %v113
  %v410 = vunpack.c.l.b16 %v114
  %v411 = vunpack.c.l.b16 %v115
  %v412 = vunpack.c.l.b16 %v116
  %v413 = vunpack.c.l.b16 %v117
  %v414 = vunpack.c.l.b16 %v118
  %v415 = vunpack.c.l.b16 %v119
  %v416 = vunpack.c.l.b16 %v120
  %v417 = vunpack.c.l.b16 %v121
  %v418 = vunpack.c.l.b16 %v122
  %v419 = vunpack.c.l.b16 %v123
  %v420 = vunpack.c.l.b16 %v124
  %v421 = vunpack.c.l.b16 %v125
  %v422 = vunpack.c.l.b16 %v126
  %v423 = vunpack.c.l.b16 %v127
  %v424 = vunpack.c.l.b16 %v128
  %v425 = vunpack.c.l.b16 %v129
  %v426 = vunpack.c.l.b16 %v130
  %v427 = vunpack.c.l.b16 %v131
  %v428 = vunpack.c.l.b16 %v132
  %v429 = vunpack.c.l.b16 %v133
  %v430 = vunpack.c.l.b16 %v134
  %v431 = vunpack.c.l.b16 %v135
  %v432 = vunpack.c.l.b16 %v136
  %v433 = vunpack.c.l.b16 %v137
  %v434 = vunpack.c.l.b16 %v138
  %v435 = vunpack.c.l.b16 %v139
  %v436 = vunpack.c.l.b16 %v140
  %v437 = vunpack.c.l.b16 %v141
  %v438 = vunpack.c.l.b16 %v142
  %v439 = vunpack.c.l.b16 %v143
  %v440 = vunpack.c.l.b16 %v144
  %v441 = vunpack.c.l.b16 %v145
  %v442 = vunpack.c.l.b16 %v146
  %v443 = vunpack.c.l.b16 %v147
  %v444 = vunpack.c.l.b16 %v148
  %v445 = vunpack.c.l.b16 %v149
  %v446 = vunpack.c.l.b16 %v150
  %v447 = vunpack.c.l.b16 %v151
  %v448 = vunpack.c.l.b16 %v152
  %v449 = vunpack.c.l.b16 %v153
  %v450 = vunpack.c.l.b16 %v154
  %v451 = vunpack.c.l.b16 %v155
  %v452 = vunpack.c.l.b16 %v156
  %v453 = vunpack.c.l.b16 %v157
  %v454 = vunpack.c.l.b16 %v158
  %v455 = vunpack.c.l.b16 %v159
  %v456 = vunpack.c.l.b16 %v160
  %v457 = vunpack.c.l.b16 %v161
  %v458 = vunpack.c.l.b16 %v162
  %v459 = vunpack.c.l.b16 %v163
  %v460 = vunpack.c.l.b16 %v164
  %v461 = vunpack.c.l.b16 %v165
  %v462 = vunpack.c.l.b16 %v166
  %v463 = vunpack.c.l.b16 %v167
  %v464 = vunpack.c.l.b16 %v168
  %v465 = vunpack.c.l.b16 %v169
  %v466 = vunpack.c.l.b16 %v170
  %v467 = vunpack.c.l.b16 %v171
  %v468 = vunpack.c.l.b16 %v172
  %v469 = vunpack.c.l.b16 %v173
  %v470 = vpack.c.b16 %v327, %v326
  %v471 = vpack.c.b16 %v329, %v328
  %v472 = vpack.c.b16 %v331, %v330
  %v473 = vpack.c.b16 %v333, %v332
  %v474 = vpack.c.b16 %v335, %v334
  %v475 = vpack.c.b16 %v337, %v336
  %v476 = vpack.c.b16 %v339, %v338
  %v477 = vpack.c.b16 %v341, %v340
  %v478 = vpack.c.b16 %v343, %v342
  %v479 = vpack.c.b16 %v345, %v344
  %v480 = vpack.c.b16 %v347, %v346
  %v481 = vpack.c.b16 %v349, %v348
  %v482 = vpack.c.b16 %v351, %v350
  %v483 = vpack.c.b16 %v353, %v352
  %v484 = vpack.c.b16 %v355, %v354
  %v485 = vpack.c.b16 %v357, %v356
  %v486 = vpack.c.b16 %v359, %v358
  %v487 = vpack.c.b16 %v361, %v360
  %v488 = vpack.c.b16 %v363, %v362
  %v489 = vpack.c.b16 %v365, %v364
  %v490 = vpack.c.b16 %v367, %v366
  %v491 = vpack.c.b16 %v369, %v368
  %v492 = vpack.c.b16 %v371, %v370
  %v493 = vpack.c.b16 %v373, %v372
  %v494 = vpack.c.b16 %v375, %v374
  %v495 = vpack.c.b16 %v377, %v376
  %v496 = vpack.c.b16 %v379, %v378
  %v497 = vpack.c.b16 %v381, %v380
  %v498 = vpack.c.b16 %v383, %v382
  %v499 = vpack.c.b16 %v385, %v384
  %v500 = vpack.c.b16 %v387, %v386
  %v501 = vpack.c.b16 %v389, %v388
  %v502 = vpack.c.b16 %v391, %v390
  %v503 = vpack.c.b16 %v393, %v392
  %v504 = vpack.c.b16 %v395, %v394
  %v505 = vpack.c.b16 %v397, %v396
  %v506 = vpack.c.b16 %v399, %v398
  %v507 = vpack.c.b16 %v401, %v400
  %v508 = vpack.c.b16 %v403, %v402
  %v509 = vpack.c.b16 %v405, %v404
  %v510 = vpack.c.b16 %v407, %v406
  %v511 = vpack.c.b16 %v409, %v408
  %v512 = vpack.c.b16 %v411, %v410
  %v513 = vpack.c.b16 %v413, %v412
  %v514 = vpack.c.b16 %v415, %v414
  %v515 = vpack.c.b16 %v417, %v416
  %v516 = vpack.c.b16 %v419, %v418
  %v517 = vpack.c.b16 %v421, %v420
  %v518 = vpack.c.b16 %v423, %v422
  %v519 = vpack.c.b16 %v425, %v424
  %v520 = vpack.c.b16 %v427, %v426
  %v521 = vpack.c.b16 %v429, %v428
  %v522 = vpack.c.b16 %v431, %v430
  %v523 = vpack.c.b16 %v433, %v432
  %v524 = vpack.c.b16 %v435, %v434
  %v525 = vpack.c.b16 %v437, %v436
  %v526 = vpack.c.b16 %v439, %v438
  %v527 = vpack.c.b16 %v441, %v440
  %v528 = vpack.c.b16 %v443, %v442
  %v529 = vpack.c.b16 %v445, %v444
  %v530 = vpack.c.b16 %v447, %v446
  %v531 = vpack.c.b16 %v449, %v448
  %v532 = vpack.c.b16 %v451, %v450
  %v533 = vpack.c.b16 %v453, %v452
  %v534 = vpack.c.b16 %v455, %v454
  %v535 = vpack.c.b16 %v457, %v456
  %v536 = vpack.c.b16 %v459, %v458
  %v537 = vpack.c.b16 %v461, %v460
  %v538 = vpack.c.b16 %v463, %v462
  %v539 = vpack.c.b16 %v465, %v464
  %v540 = vpack.c.b16 %v467, %v466
  %v541 = vpack.c.b16 %v469, %v468
  %vm542 = vcmask 31744
  %v544 = vsel %vm542, %v470, 0
  %v547 = vsel %vm542, %v471, 0
  %v550 = vsel %vm542, %v472, 0
  %v553 = vsel %vm542, %v473, 0
  %v556 = vsel %vm542, %v474, 0
  %v559 = vsel %vm542, %v475, 0
  %v562 = vsel %vm542, %v476, 0
  %v565 = vsel %vm542, %v477, 0
  %v568 = vsel %vm542, %v478, 0
  %v571 = vsel %vm542, %v479, 0
  %v574 = vsel %vm542, %v480, 0
  %v577 = vsel %vm542, %v481, 0
  %v580 = vsel %vm542, %v482, 0
  %v583 = vsel %vm542, %v483, 0
  %v586 = vsel %vm542, %v484, 0
  %v589 = vsel %vm542, %v485, 0
  %v592 = vsel %vm542, %v486, 0
  %v595 = vsel %vm542, %v487, 0
  %v598 = vsel %vm542, %v488, 0
  %v601 = vsel %vm542, %v489, 0
  %v604 = vsel %vm542, %v490, 0
  %v607 = vsel %vm542, %v491, 0
  %v610 = vsel %vm542, %v492, 0
  %v613 = vsel %vm542, %v493, 0
  %v616 = vsel %vm542, %v494, 0
  %v619 = vsel %vm542, %v495, 0
  %v622 = vsel %vm542, %v496, 0
  %v625 = vsel %vm542, %v497, 0
  %v628 = vsel %vm542, %v498, 0
  %v631 = vsel %vm542, %v499, 0
  %v634 = vsel %vm542, %v500, 0
  %v637 = vsel %vm542, %v501, 0
  %v640 = vsel %vm542, %v502, 0
  %v643 = vsel %vm542, %v503, 0
  %v646 = vsel %vm542, %v504, 0
  %v649 = vsel %vm542, %v505, 0
  %v652 = vsel %vm542, %v506, 0
  %v655 = vsel %vm542, %v507, 0
  %v658 = vsel %vm542, %v508, 0
  %v661 = vsel %vm542, %v509, 0
  %v664 = vsel %vm542, %v510, 0
  %v667 = vsel %vm542, %v511, 0
  %v670 = vsel %vm542, %v512, 0
  %v673 = vsel %vm542, %v513, 0
  %v676 = vsel %vm542, %v514, 0
  %v679 = vsel %vm542, %v515, 0
  %v682 = vsel %vm542, %v516, 0
  %v685 = vsel %vm542, %v517, 0
  %v688 = vsel %vm542, %v518, 0
  %v691 = vsel %vm542, %v519, 0
  %v694 = vsel %vm542, %v520, 0
  %v697 = vsel %vm542, %v521, 0
  %v700 = vsel %vm542, %v522, 0
  %v703 = vsel %vm542, %v523, 0
  %v706 = vsel %vm542, %v524, 0
  %v709 = vsel %vm542, %v525, 0
  %v712 = vsel %vm542, %v526, 0
  %v715 = vsel %vm542, %v527, 0
  %v718 = vsel %vm542, %v528, 0
  %v721 = vsel %vm542, %v529, 0
  %v724 = vsel %vm542, %v530, 0
  %v727 = vsel %vm542, %v531, 0
  %v730 = vsel %vm542, %v532, 0
  %v733 = vsel %vm542, %v533, 0
  %v736 = vsel %vm542, %v534, 0
  %v739 = vsel %vm542, %v535, 0
  %v742 = vsel %vm542, %v536, 0
  %v745 = vsel %vm542, %v537, 0
  %v748 = vsel %vm542, %v538, 0
  %v751 = vsel %vm542, %v539, 0
  %v754 = vsel %vm542, %v540, 0
  %v757 = vsel %vm542, %v541, 0
  %vm759 = vcmask 1041408
  %v761 = vsel %vm759, %v174, 0
  %763 = vmatprep.subr.bf16.mxu0 0
  %764 = vmatpush1.bf16.msra.mxu0 0
  %765 = vmatprep.subr.bf16.mxu0 0
  %766 = vmatpush1.bf16.msra.mxu0 0
  %767 = vmatprep.subr.bf16.mxu0 0
  %768 = vmatpush1.bf16.msra.mxu0 0
  %769 = vmatprep.subr.bf16.mxu0 0
  %770 = vmatpush1.bf16.msra.mxu0 0
  %771 = vmatprep.subr.bf16.mxu0 0
  %772 = vmatpush1.bf16.msra.mxu0 0
  %773 = vmatprep.subr.bf16.mxu0 0
  %774 = vmatpush1.bf16.msra.mxu0 0
  %775 = vmatprep.subr.bf16.mxu0 0
  %776 = vmatpush1.bf16.msra.mxu0 0
  %777 = vmatprep.subr.bf16.mxu0 0
  %778 = vmatpush1.bf16.msra.mxu0 %v761
  %779 = vmatprep.subr.bf16.mxu0 0
  %780 = vmatpush2.bf16.msra.mxu0 0
  %781 = vmatprep.subr.bf16.mxu0 0
  %782 = vmatpush2.bf16.msra.mxu0 0
  %783 = vmatprep.subr.bf16.mxu0 0
  %784 = vmatpush2.bf16.msra.mxu0 0
  %785 = vmatprep.subr.bf16.mxu0 0
  %786 = vmatpush2.bf16.msra.mxu0 0
  %787 = vmatprep.subr.bf16.mxu0 0
  %788 = vmatpush2.bf16.msra.mxu0 0
  %789 = vmatprep.subr.bf16.mxu0 0
  %790 = vmatpush2.bf16.msra.mxu0 0
  %791 = vmatprep.subr.bf16.mxu0 0
  %792 = vmatpush2.bf16.msra.mxu0 0
  %793 = vmatprep.subr.bf16.mxu0 0
  %794 = vmatpush2.bf16.msra.mxu0 0
  %795 = vmatprep.mubr.bf16.mxu0 0
  %796 = vmatmul.mubr.bf16.gmra.mxu0 %v544
  %v797 = vpop.f32.mrf.mxu0
  %v798 = vadd.f32 %v180, %v797
  %v799 = vpop.f32.mrf.mxu0
  %v800 = vpop.f32.mrf.mxu0
  %v801 = vadd.f32 %v180, %v800
  %v802 = vpop.f32.mrf.mxu0
  %803 = vmatprep.mubr.bf16.mxu0 0
  %804 = vmatmul.mubr.bf16.gmra.mxu0 %v547
  %v805 = vpop.f32.mrf.mxu0
  %v806 = vadd.f32 %v180, %v805
  %v807 = vpop.f32.mrf.mxu0
  %v808 = vpop.f32.mrf.mxu0
  %v809 = vadd.f32 %v180, %v808
  %v810 = vpop.f32.mrf.mxu0
  %811 = vmatprep.mubr.bf16.mxu0 0
  %812 = vmatmul.mubr.bf16.gmra.mxu0 %v550
  %v813 = vpop.f32.mrf.mxu0
  %v814 = vadd.f32 %v180, %v813
  %v815 = vpop.f32.mrf.mxu0
  %v816 = vpop.f32.mrf.mxu0
  %v817 = vadd.f32 %v180, %v816
  %v818 = vpop.f32.mrf.mxu0
  %819 = vmatprep.mubr.bf16.mxu0 0
  %820 = vmatmul.mubr.bf16.gmra.mxu0 %v553
  %v821 = vpop.f32.mrf.mxu0
  %v822 = vadd.f32 %v180, %v821
  %v823 = vpop.f32.mrf.mxu0
  %v824 = vpop.f32.mrf.mxu0
  %v825 = vadd.f32 %v180, %v824
  %v826 = vpop.f32.mrf.mxu0
  %827 = vmatprep.mubr.bf16.mxu0 0
  %828 = vmatmul.mubr.bf16.gmra.mxu0 %v556
  %v829 = vpop.f32.mrf.mxu0
  %v830 = vadd.f32 %v180, %v829
  %v831 = vpop.f32.mrf.mxu0
  %v832 = vpop.f32.mrf.mxu0
  %v833 = vadd.f32 %v180, %v832
  %v834 = vpop.f32.mrf.mxu0
  %835 = vmatprep.mubr.bf16.mxu0 0
  %836 = vmatmul.mubr.bf16.gmra.mxu0 %v559
  %v837 = vpop.f32.mrf.mxu0
  %v838 = vadd.f32 %v180, %v837
  %v839 = vpop.f32.mrf.mxu0
  %v840 = vpop.f32.mrf.mxu0
  %v841 = vadd.f32 %v180, %v840
  %v842 = vpop.f32.mrf.mxu0
  %843 = vmatprep.mubr.bf16.mxu0 0
  %844 = vmatmul.mubr.bf16.gmra.mxu0 %v562
  %v845 = vpop.f32.mrf.mxu0
  %v846 = vadd.f32 %v180, %v845
  %v847 = vpop.f32.mrf.mxu0
  %v848 = vpop.f32.mrf.mxu0
  %v849 = vadd.f32 %v180, %v848
  %v850 = vpop.f32.mrf.mxu0
  %851 = vmatprep.mubr.bf16.mxu0 0
  %852 = vmatmul.mubr.bf16.gmra.mxu0 %v565
  %v853 = vpop.f32.mrf.mxu0
  %v854 = vadd.f32 %v180, %v853
  %v855 = vpop.f32.mrf.mxu0
  %v856 = vpop.f32.mrf.mxu0
  %v857 = vadd.f32 %v180, %v856
  %v858 = vpop.f32.mrf.mxu0
  %859 = vmatprep.mubr.bf16.mxu0 0
  %860 = vmatmul.mubr.bf16.gmra.mxu0 %v568
  %v861 = vpop.f32.mrf.mxu0
  %v862 = vadd.f32 %v180, %v861
  %v863 = vpop.f32.mrf.mxu0
  %v864 = vpop.f32.mrf.mxu0
  %v865 = vadd.f32 %v180, %v864
  %v866 = vpop.f32.mrf.mxu0
  %867 = vmatprep.mubr.bf16.mxu0 0
  %868 = vmatmul.mubr.bf16.gmra.mxu0 %v571
  %v869 = vpop.f32.mrf.mxu0
  %v870 = vadd.f32 %v180, %v869
  %v871 = vpop.f32.mrf.mxu0
  %v872 = vpop.f32.mrf.mxu0
  %v873 = vpop.f32.mrf.mxu0
  %874 = vmatprep.mubr.bf16.mxu0 0
  %875 = vmatmul.mubr.bf16.gmra.mxu0 %v574
  %v876 = vpop.f32.mrf.mxu0
  %v877 = vadd.f32 %v180, %v876
  %v878 = vpop.f32.mrf.mxu0
  %v879 = vpop.f32.mrf.mxu0
  %v880 = vpop.f32.mrf.mxu0
  %881 = vmatprep.mubr.bf16.mxu0 0
  %882 = vmatmul.mubr.bf16.gmra.mxu0 %v577
  %v883 = vpop.f32.mrf.mxu0
  %v884 = vadd.f32 %v180, %v883
  %v885 = vpop.f32.mrf.mxu0
  %v886 = vpop.f32.mrf.mxu0
  %v887 = vpop.f32.mrf.mxu0
  %888 = vmatprep.mubr.bf16.mxu0 0
  %889 = vmatmul.mubr.bf16.gmra.mxu0 %v580
  %v890 = vpop.f32.mrf.mxu0
  %v891 = vadd.f32 %v180, %v890
  %v892 = vpop.f32.mrf.mxu0
  %v893 = vpop.f32.mrf.mxu0
  %v894 = vpop.f32.mrf.mxu0
  %895 = vmatprep.mubr.bf16.mxu0 0
  %896 = vmatmul.mubr.bf16.gmra.mxu0 %v583
  %v897 = vpop.f32.mrf.mxu0
  %v898 = vadd.f32 %v180, %v897
  %v899 = vpop.f32.mrf.mxu0
  %v900 = vpop.f32.mrf.mxu0
  %v901 = vpop.f32.mrf.mxu0
  %902 = vmatprep.mubr.bf16.mxu0 0
  %903 = vmatmul.mubr.bf16.gmra.mxu0 %v586
  %v904 = vpop.f32.mrf.mxu0
  %v905 = vadd.f32 %v180, %v904
  %v906 = vpop.f32.mrf.mxu0
  %v907 = vpop.f32.mrf.mxu0
  %v908 = vpop.f32.mrf.mxu0
  %909 = vmatprep.mubr.bf16.mxu0 0
  %910 = vmatmul.mubr.bf16.gmra.mxu0 %v589
  %v911 = vpop.f32.mrf.mxu0
  %v912 = vadd.f32 %v180, %v911
  %v913 = vpop.f32.mrf.mxu0
  %v914 = vpop.f32.mrf.mxu0
  %v915 = vpop.f32.mrf.mxu0
  %916 = vmatprep.mubr.bf16.mxu0 0
  %917 = vmatmul.mubr.bf16.gmra.mxu0 %v592
  %v918 = vpop.f32.mrf.mxu0
  %v919 = vadd.f32 %v180, %v918
  %v920 = vpop.f32.mrf.mxu0
  %v921 = vpop.f32.mrf.mxu0
  %v922 = vpop.f32.mrf.mxu0
  %923 = vmatprep.mubr.bf16.mxu0 0
  %924 = vmatmul.mubr.bf16.gmra.mxu0 %v595
  %v925 = vpop.f32.mrf.mxu0
  %v926 = vadd.f32 %v180, %v925
  %v927 = vpop.f32.mrf.mxu0
  %v928 = vpop.f32.mrf.mxu0
  %v929 = vpop.f32.mrf.mxu0
  %930 = vmatprep.mubr.bf16.mxu0 0
  %931 = vmatmul.mubr.bf16.gmra.mxu0 %v598
  %v932 = vpop.f32.mrf.mxu0
  %v933 = vadd.f32 %v180, %v932
  %v934 = vpop.f32.mrf.mxu0
  %v935 = vpop.f32.mrf.mxu0
  %v936 = vadd.f32 %v180, %v935
  %v937 = vpop.f32.mrf.mxu0
  %938 = vmatprep.mubr.bf16.mxu0 0
  %939 = vmatmul.mubr.bf16.gmra.mxu0 %v601
  %v940 = vpop.f32.mrf.mxu0
  %v941 = vadd.f32 %v180, %v940
  %v942 = vpop.f32.mrf.mxu0
  %v943 = vpop.f32.mrf.mxu0
  %v944 = vadd.f32 %v180, %v943
  %v945 = vpop.f32.mrf.mxu0
  %946 = vmatprep.mubr.bf16.mxu0 0
  %947 = vmatmul.mubr.bf16.gmra.mxu0 %v604
  %v948 = vpop.f32.mrf.mxu0
  %v949 = vadd.f32 %v180, %v948
  %v950 = vpop.f32.mrf.mxu0
  %v951 = vpop.f32.mrf.mxu0
  %v952 = vadd.f32 %v180, %v951
  %v953 = vpop.f32.mrf.mxu0
  %954 = vmatprep.mubr.bf16.mxu0 0
  %955 = vmatmul.mubr.bf16.gmra.mxu0 %v607
  %v956 = vpop.f32.mrf.mxu0
  %v957 = vadd.f32 %v180, %v956
  %v958 = vpop.f32.mrf.mxu0
  %v959 = vpop.f32.mrf.mxu0
  %v960 = vadd.f32 %v180, %v959
  %v961 = vpop.f32.mrf.mxu0
  %962 = vmatprep.mubr.bf16.mxu0 0
  %963 = vmatmul.mubr.bf16.gmra.mxu0 %v610
  %v964 = vpop.f32.mrf.mxu0
  %v965 = vadd.f32 %v180, %v964
  %v966 = vpop.f32.mrf.mxu0
  %v967 = vpop.f32.mrf.mxu0
  %v968 = vadd.f32 %v180, %v967
  %v969 = vpop.f32.mrf.mxu0
  %970 = vmatprep.mubr.bf16.mxu0 0
  %971 = vmatmul.mubr.bf16.gmra.mxu0 %v613
  %v972 = vpop.f32.mrf.mxu0
  %v973 = vadd.f32 %v180, %v972
  %v974 = vpop.f32.mrf.mxu0
  %v975 = vpop.f32.mrf.mxu0
  %v976 = vadd.f32 %v180, %v975
  %v977 = vpop.f32.mrf.mxu0
  %978 = vmatprep.mubr.bf16.mxu0 0
  %979 = vmatmul.mubr.bf16.gmra.mxu0 %v616
  %v980 = vpop.f32.mrf.mxu0
  %v981 = vadd.f32 %v180, %v980
  %v982 = vpop.f32.mrf.mxu0
  %v983 = vpop.f32.mrf.mxu0
  %v984 = vadd.f32 %v180, %v983
  %v985 = vpop.f32.mrf.mxu0
  %986 = vmatprep.mubr.bf16.mxu0 0
  %987 = vmatmul.mubr.bf16.gmra.mxu0 %v619
  %v988 = vpop.f32.mrf.mxu0
  %v989 = vadd.f32 %v180, %v988
  %v990 = vpop.f32.mrf.mxu0
  %v991 = vpop.f32.mrf.mxu0
  %v992 = vadd.f32 %v180, %v991
  %v993 = vpop.f32.mrf.mxu0
  %994 = vmatprep.mubr.bf16.mxu0 0
  %995 = vmatmul.mubr.bf16.gmra.mxu0 %v622
  %v996 = vpop.f32.mrf.mxu0
  %v997 = vpop.f32.mrf.mxu0
  %v998 = vpop.f32.mrf.mxu0
  %v999 = vpop.f32.mrf.mxu0
  %1000 = vmatprep.mubr.bf16.mxu0 0
  %1001 = vmatmul.mubr.bf16.gmra.mxu0 %v625
  %v1002 = vpop.f32.mrf.mxu0
  %v1003 = vadd.f32 %v180, %v1002
  %v1004 = vpop.f32.mrf.mxu0
  %v1005 = vpop.f32.mrf.mxu0
  %v1006 = vpop.f32.mrf.mxu0
  %1007 = vmatprep.mubr.bf16.mxu0 0
  %1008 = vmatmul.mubr.bf16.gmra.mxu0 %v628
  %v1009 = vpop.f32.mrf.mxu0
  %v1010 = vadd.f32 %v180, %v1009
  %v1011 = vpop.f32.mrf.mxu0
  %v1012 = vpop.f32.mrf.mxu0
  %v1013 = vpop.f32.mrf.mxu0
  %1014 = vmatprep.mubr.bf16.mxu0 0
  %1015 = vmatmul.mubr.bf16.gmra.mxu0 %v631
  %v1016 = vpop.f32.mrf.mxu0
  %v1017 = vadd.f32 %v180, %v1016
  %v1018 = vpop.f32.mrf.mxu0
  %v1019 = vpop.f32.mrf.mxu0
  %v1020 = vpop.f32.mrf.mxu0
  %1021 = vmatprep.mubr.bf16.mxu0 0
  %1022 = vmatmul.mubr.bf16.gmra.mxu0 %v634
  %v1023 = vpop.f32.mrf.mxu0
  %v1024 = vadd.f32 %v180, %v1023
  %v1025 = vpop.f32.mrf.mxu0
  %v1026 = vpop.f32.mrf.mxu0
  %v1027 = vpop.f32.mrf.mxu0
  %1028 = vmatprep.mubr.bf16.mxu0 0
  %1029 = vmatmul.mubr.bf16.gmra.mxu0 %v637
  %v1030 = vpop.f32.mrf.mxu0
  %v1031 = vadd.f32 %v180, %v1030
  %v1032 = vpop.f32.mrf.mxu0
  %v1033 = vpop.f32.mrf.mxu0
  %v1034 = vpop.f32.mrf.mxu0
  %1035 = vmatprep.mubr.bf16.mxu0 0
  %1036 = vmatmul.mubr.bf16.gmra.mxu0 %v640
  %v1037 = vpop.f32.mrf.mxu0
  %v1038 = vadd.f32 %v180, %v1037
  %v1039 = vpop.f32.mrf.mxu0
  %v1040 = vpop.f32.mrf.mxu0
  %v1041 = vpop.f32.mrf.mxu0
  %1042 = vmatprep.mubr.bf16.mxu0 0
  %1043 = vmatmul.mubr.bf16.gmra.mxu0 %v643
  %v1044 = vpop.f32.mrf.mxu0
  %v1045 = vadd.f32 %v180, %v1044
  %v1046 = vpop.f32.mrf.mxu0
  %v1047 = vpop.f32.mrf.mxu0
  %v1048 = vpop.f32.mrf.mxu0
  %1049 = vmatprep.mubr.bf16.mxu0 0
  %1050 = vmatmul.mubr.bf16.gmra.mxu0 %v646
  %v1051 = vpop.f32.mrf.mxu0
  %v1052 = vadd.f32 %v180, %v1051
  %v1053 = vpop.f32.mrf.mxu0
  %v1054 = vpop.f32.mrf.mxu0
  %v1055 = vpop.f32.mrf.mxu0
  %1056 = vmatprep.mubr.bf16.mxu0 0
  %1057 = vmatmul.mubr.bf16.gmra.mxu0 %v649
  %v1058 = vpop.f32.mrf.mxu0
  %v1059 = vpop.f32.mrf.mxu0
  %v1060 = vpop.f32.mrf.mxu0
  %v1061 = vpop.f32.mrf.mxu0
  %1062 = vmatprep.mubr.bf16.mxu0 0
  %1063 = vmatmul.mubr.bf16.gmra.mxu0 %v652
  %v1064 = vpop.f32.mrf.mxu0
  %v1065 = vadd.f32 %v180, %v1064
  %v1066 = vpop.f32.mrf.mxu0
  %v1067 = vpop.f32.mrf.mxu0
  %v1068 = vadd.f32 %v180, %v1067
  %v1069 = vpop.f32.mrf.mxu0
  %1070 = vmatprep.mubr.bf16.mxu0 0
  %1071 = vmatmul.mubr.bf16.gmra.mxu0 %v655
  %v1072 = vpop.f32.mrf.mxu0
  %v1073 = vadd.f32 %v180, %v1072
  %v1074 = vpop.f32.mrf.mxu0
  %v1075 = vpop.f32.mrf.mxu0
  %v1076 = vadd.f32 %v180, %v1075
  %v1077 = vpop.f32.mrf.mxu0
  %1078 = vmatprep.mubr.bf16.mxu0 0
  %1079 = vmatmul.mubr.bf16.gmra.mxu0 %v658
  %v1080 = vpop.f32.mrf.mxu0
  %v1081 = vadd.f32 %v180, %v1080
  %v1082 = vpop.f32.mrf.mxu0
  %v1083 = vpop.f32.mrf.mxu0
  %v1084 = vadd.f32 %v180, %v1083
  %v1085 = vpop.f32.mrf.mxu0
  %1086 = vmatprep.mubr.bf16.mxu0 0
  %1087 = vmatmul.mubr.bf16.gmra.mxu0 %v661
  %v1088 = vpop.f32.mrf.mxu0
  %v1089 = vadd.f32 %v180, %v1088
  %v1090 = vpop.f32.mrf.mxu0
  %v1091 = vpop.f32.mrf.mxu0
  %v1092 = vadd.f32 %v180, %v1091
  %v1093 = vpop.f32.mrf.mxu0
  %1094 = vmatprep.mubr.bf16.mxu0 0
  %1095 = vmatmul.mubr.bf16.gmra.mxu0 %v664
  %v1096 = vpop.f32.mrf.mxu0
  %v1097 = vadd.f32 %v180, %v1096
  %v1098 = vpop.f32.mrf.mxu0
  %v1099 = vpop.f32.mrf.mxu0
  %v1100 = vadd.f32 %v180, %v1099
  %v1101 = vpop.f32.mrf.mxu0
  %1102 = vmatprep.mubr.bf16.mxu0 0
  %1103 = vmatmul.mubr.bf16.gmra.mxu0 %v667
  %v1104 = vpop.f32.mrf.mxu0
  %v1105 = vadd.f32 %v180, %v1104
  %v1106 = vpop.f32.mrf.mxu0
  %v1107 = vpop.f32.mrf.mxu0
  %v1108 = vadd.f32 %v180, %v1107
  %v1109 = vpop.f32.mrf.mxu0
  %1110 = vmatprep.mubr.bf16.mxu0 0
  %1111 = vmatmul.mubr.bf16.gmra.mxu0 %v670
  %v1112 = vpop.f32.mrf.mxu0
  %v1113 = vadd.f32 %v180, %v1112
  %v1114 = vpop.f32.mrf.mxu0
  %v1115 = vpop.f32.mrf.mxu0
  %v1116 = vadd.f32 %v180, %v1115
  %v1117 = vpop.f32.mrf.mxu0
  %1118 = vmatprep.mubr.bf16.mxu0 0
  %1119 = vmatmul.mubr.bf16.gmra.mxu0 %v673
  %v1120 = vpop.f32.mrf.mxu0
  %v1121 = vadd.f32 %v180, %v1120
  %v1122 = vpop.f32.mrf.mxu0
  %v1123 = vpop.f32.mrf.mxu0
  %v1124 = vadd.f32 %v180, %v1123
  %v1125 = vpop.f32.mrf.mxu0
  %1126 = vmatprep.mubr.bf16.mxu0 0
  %1127 = vmatmul.mubr.bf16.gmra.mxu0 %v676
  %v1128 = vpop.f32.mrf.mxu0
  %v1129 = vadd.f32 %v180, %v1128
  %v1130 = vpop.f32.mrf.mxu0
  %v1131 = vpop.f32.mrf.mxu0
  %v1132 = vadd.f32 %v180, %v1131
  %v1133 = vpop.f32.mrf.mxu0
  %1134 = vmatprep.mubr.bf16.mxu0 0
  %1135 = vmatmul.mubr.bf16.gmra.mxu0 %v679
  %v1136 = vpop.f32.mrf.mxu0
  %v1137 = vadd.f32 %v180, %v1136
  %v1138 = vpop.f32.mrf.mxu0
  %v1139 = vpop.f32.mrf.mxu0
  %v1140 = vpop.f32.mrf.mxu0
  %1141 = vmatprep.mubr.bf16.mxu0 0
  %1142 = vmatmul.mubr.bf16.gmra.mxu0 %v682
  %v1143 = vpop.f32.mrf.mxu0
  %v1144 = vadd.f32 %v180, %v1143
  %v1145 = vpop.f32.mrf.mxu0
  %v1146 = vpop.f32.mrf.mxu0
  %v1147 = vpop.f32.mrf.mxu0
  %1148 = vmatprep.mubr.bf16.mxu0 0
  %1149 = vmatmul.mubr.bf16.gmra.mxu0 %v685
  %v1150 = vpop.f32.mrf.mxu0
  %v1151 = vadd.f32 %v180, %v1150
  %v1152 = vpop.f32.mrf.mxu0
  %v1153 = vpop.f32.mrf.mxu0
  %v1154 = vpop.f32.mrf.mxu0
  %1155 = vmatprep.mubr.bf16.mxu0 0
  %1156 = vmatmul.mubr.bf16.gmra.mxu0 %v688
  %v1157 = vpop.f32.mrf.mxu0
  %v1158 = vadd.f32 %v180, %v1157
  %v1159 = vpop.f32.mrf.mxu0
  %v1160 = vpop.f32.mrf.mxu0
  %v1161 = vpop.f32.mrf.mxu0
  %1162 = vmatprep.mubr.bf16.mxu0 0
  %1163 = vmatmul.mubr.bf16.gmra.mxu0 %v691
  %v1164 = vpop.f32.mrf.mxu0
  %v1165 = vadd.f32 %v180, %v1164
  %v1166 = vpop.f32.mrf.mxu0
  %v1167 = vpop.f32.mrf.mxu0
  %v1168 = vpop.f32.mrf.mxu0
  %1169 = vmatprep.mubr.bf16.mxu0 0
  %1170 = vmatmul.mubr.bf16.gmra.mxu0 %v694
  %v1171 = vpop.f32.mrf.mxu0
  %v1172 = vadd.f32 %v180, %v1171
  %v1173 = vpop.f32.mrf.mxu0
  %v1174 = vpop.f32.mrf.mxu0
  %v1175 = vpop.f32.mrf.mxu0
  %1176 = vmatprep.mubr.bf16.mxu0 0
  %1177 = vmatmul.mubr.bf16.gmra.mxu0 %v697
  %v1178 = vpop.f32.mrf.mxu0
  %v1179 = vadd.f32 %v180, %v1178
  %v1180 = vpop.f32.mrf.mxu0
  %v1181 = vpop.f32.mrf.mxu0
  %v1182 = vpop.f32.mrf.mxu0
  %1183 = vmatprep.mubr.bf16.mxu0 0
  %1184 = vmatmul.mubr.bf16.gmra.mxu0 %v700
  %v1185 = vpop.f32.mrf.mxu0
  %v1186 = vadd.f32 %v180, %v1185
  %v1187 = vpop.f32.mrf.mxu0
  %v1188 = vpop.f32.mrf.mxu0
  %v1189 = vpop.f32.mrf.mxu0
  %1190 = vmatprep.mubr.bf16.mxu0 0
  %1191 = vmatmul.mubr.bf16.gmra.mxu0 %v703
  %v1192 = vpop.f32.mrf.mxu0
  %v1193 = vadd.f32 %v180, %v1192
  %v1194 = vpop.f32.mrf.mxu0
  %v1195 = vpop.f32.mrf.mxu0
  %v1196 = vpop.f32.mrf.mxu0
  %1197 = vmatprep.mubr.bf16.mxu0 0
  %1198 = vmatmul.mubr.bf16.gmra.mxu0 %v706
  %v1199 = vpop.f32.mrf.mxu0
  %v1200 = vadd.f32 %v180, %v1199
  %v1201 = vpop.f32.mrf.mxu0
  %v1202 = vpop.f32.mrf.mxu0
  %v1203 = vadd.f32 %v180, %v1202
  %v1204 = vpop.f32.mrf.mxu0
  %1205 = vmatprep.mubr.bf16.mxu0 0
  %1206 = vmatmul.mubr.bf16.gmra.mxu0 %v709
  %v1207 = vpop.f32.mrf.mxu0
  %v1208 = vadd.f32 %v180, %v1207
  %v1209 = vpop.f32.mrf.mxu0
  %v1210 = vpop.f32.mrf.mxu0
  %v1211 = vadd.f32 %v180, %v1210
  %v1212 = vpop.f32.mrf.mxu0
  %1213 = vmatprep.mubr.bf16.mxu0 0
  %1214 = vmatmul.mubr.bf16.gmra.mxu0 %v712
  %v1215 = vpop.f32.mrf.mxu0
  %v1216 = vadd.f32 %v180, %v1215
  %v1217 = vpop.f32.mrf.mxu0
  %v1218 = vpop.f32.mrf.mxu0
  %v1219 = vadd.f32 %v180, %v1218
  %v1220 = vpop.f32.mrf.mxu0
  %1221 = vmatprep.mubr.bf16.mxu0 0
  %1222 = vmatmul.mubr.bf16.gmra.mxu0 %v715
  %v1223 = vpop.f32.mrf.mxu0
  %v1224 = vadd.f32 %v180, %v1223
  %v1225 = vpop.f32.mrf.mxu0
  %v1226 = vpop.f32.mrf.mxu0
  %v1227 = vadd.f32 %v180, %v1226
  %v1228 = vpop.f32.mrf.mxu0
  %1229 = vmatprep.mubr.bf16.mxu0 0
  %1230 = vmatmul.mubr.bf16.gmra.mxu0 %v718
  %v1231 = vpop.f32.mrf.mxu0
  %v1232 = vadd.f32 %v180, %v1231
  %v1233 = vpop.f32.mrf.mxu0
  %v1234 = vpop.f32.mrf.mxu0
  %v1235 = vadd.f32 %v180, %v1234
  %v1236 = vpop.f32.mrf.mxu0
  %1237 = vmatprep.mubr.bf16.mxu0 0
  %1238 = vmatmul.mubr.bf16.gmra.mxu0 %v721
  %v1239 = vpop.f32.mrf.mxu0
  %v1240 = vadd.f32 %v180, %v1239
  %v1241 = vpop.f32.mrf.mxu0
  %v1242 = vpop.f32.mrf.mxu0
  %v1243 = vadd.f32 %v180, %v1242
  %v1244 = vpop.f32.mrf.mxu0
  %1245 = vmatprep.mubr.bf16.mxu0 0
  %1246 = vmatmul.mubr.bf16.gmra.mxu0 %v724
  %v1247 = vpop.f32.mrf.mxu0
  %v1248 = vadd.f32 %v180, %v1247
  %v1249 = vpop.f32.mrf.mxu0
  %v1250 = vpop.f32.mrf.mxu0
  %v1251 = vadd.f32 %v180, %v1250
  %v1252 = vpop.f32.mrf.mxu0
  %1253 = vmatprep.mubr.bf16.mxu0 0
  %1254 = vmatmul.mubr.bf16.gmra.mxu0 %v727
  %v1255 = vpop.f32.mrf.mxu0
  %v1256 = vadd.f32 %v180, %v1255
  %v1257 = vpop.f32.mrf.mxu0
  %v1258 = vpop.f32.mrf.mxu0
  %v1259 = vadd.f32 %v180, %v1258
  %v1260 = vpop.f32.mrf.mxu0
  %1261 = vmatprep.mubr.bf16.mxu0 0
  %1262 = vmatmul.mubr.bf16.gmra.mxu0 %v730
  %v1263 = vpop.f32.mrf.mxu0
  %v1264 = vpop.f32.mrf.mxu0
  %v1265 = vpop.f32.mrf.mxu0
  %v1266 = vpop.f32.mrf.mxu0
  %1267 = vmatprep.mubr.bf16.mxu0 0
  %1268 = vmatmul.mubr.bf16.gmra.mxu0 %v733
  %v1269 = vpop.f32.mrf.mxu0
  %v1270 = vadd.f32 %v180, %v1269
  %v1271 = vpop.f32.mrf.mxu0
  %v1272 = vpop.f32.mrf.mxu0
  %v1273 = vpop.f32.mrf.mxu0
  %1274 = vmatprep.mubr.bf16.mxu0 0
  %1275 = vmatmul.mubr.bf16.gmra.mxu0 %v736
  %v1276 = vpop.f32.mrf.mxu0
  %v1277 = vadd.f32 %v180, %v1276
  %v1278 = vpop.f32.mrf.mxu0
  %v1279 = vpop.f32.mrf.mxu0
  %v1280 = vpop.f32.mrf.mxu0
  %1281 = vmatprep.mubr.bf16.mxu0 0
  %1282 = vmatmul.mubr.bf16.gmra.mxu0 %v739
  %v1283 = vpop.f32.mrf.mxu0
  %v1284 = vadd.f32 %v180, %v1283
  %v1285 = vpop.f32.mrf.mxu0
  %v1286 = vpop.f32.mrf.mxu0
  %v1287 = vpop.f32.mrf.mxu0
  %1288 = vmatprep.mubr.bf16.mxu0 0
  %1289 = vmatmul.mubr.bf16.gmra.mxu0 %v742
  %v1290 = vpop.f32.mrf.mxu0
  %v1291 = vadd.f32 %v180, %v1290
  %v1292 = vpop.f32.mrf.mxu0
  %v1293 = vpop.f32.mrf.mxu0
  %v1294 = vpop.f32.mrf.mxu0
  %1295 = vmatprep.mubr.bf16.mxu0 0
  %1296 = vmatmul.mubr.bf16.gmra.mxu0 %v745
  %v1297 = vpop.f32.mrf.mxu0
  %v1298 = vadd.f32 %v180, %v1297
  %v1299 = vpop.f32.mrf.mxu0
  %v1300 = vpop.f32.mrf.mxu0
  %v1301 = vpop.f32.mrf.mxu0
  %1302 = vmatprep.mubr.bf16.mxu0 0
  %1303 = vmatmul.mubr.bf16.gmra.mxu0 %v748
  %v1304 = vpop.f32.mrf.mxu0
  %v1305 = vadd.f32 %v180, %v1304
  %v1306 = vpop.f32.mrf.mxu0
  %v1307 = vpop.f32.mrf.mxu0
  %v1308 = vpop.f32.mrf.mxu0
  %1309 = vmatprep.mubr.bf16.mxu0 0
  %1310 = vmatmul.mubr.bf16.gmra.mxu0 %v751
  %v1311 = vpop.f32.mrf.mxu0
  %v1312 = vadd.f32 %v180, %v1311
  %v1313 = vpop.f32.mrf.mxu0
  %v1314 = vpop.f32.mrf.mxu0
  %v1315 = vpop.f32.mrf.mxu0
  %1316 = vmatprep.mubr.bf16.mxu0 0
  %1317 = vmatmul.mubr.bf16.gmra.mxu0 %v754
  %v1318 = vpop.f32.mrf.mxu0
  %v1319 = vadd.f32 %v180, %v1318
  %v1320 = vpop.f32.mrf.mxu0
  %v1321 = vpop.f32.mrf.mxu0
  %v1322 = vpop.f32.mrf.mxu0
  %1323 = vmatprep.mubr.bf16.mxu0 0
  %1324 = vmatmul.mubr.bf16.gmra.mxu0 %v757
  %v1325 = vpop.f32.mrf.mxu0
  %v1326 = vpop.f32.mrf.mxu0
  %v1327 = vpop.f32.mrf.mxu0
  %v1328 = vpop.f32.mrf.mxu0
  %1329 = vdwg.mxu0
  %v1330 = vmax.f32 %v798, 0.0
  %v1331 = vmax.f32 %v801, 0.0
  %v1332 = vmax.f32 %v806, 0.0
  %v1333 = vmax.f32 %v809, 0.0
  %v1334 = vmax.f32 %v814, 0.0
  %v1335 = vmax.f32 %v817, 0.0
  %v1336 = vmax.f32 %v822, 0.0
  %v1337 = vmax.f32 %v825, 0.0
  %v1338 = vmax.f32 %v830, 0.0
  %v1339 = vmax.f32 %v833, 0.0
  %v1340 = vmax.f32 %v838, 0.0
  %v1341 = vmax.f32 %v841, 0.0
  %v1342 = vmax.f32 %v846, 0.0
  %v1343 = vmax.f32 %v849, 0.0
  %v1344 = vmax.f32 %v854, 0.0
  %v1345 = vmax.f32 %v857, 0.0
  %v1346 = vmax.f32 %v862, 0.0
  %v1347 = vmax.f32 %v865, 0.0
  %v1348 = vmax.f32 %v870, 0.0
  %v1349 = vmax.f32 %v877, 0.0
  %v1350 = vmax.f32 %v884, 0.0
  %v1351 = vmax.f32 %v891, 0.0
  %v1352 = vmax.f32 %v898, 0.0
  %v1353 = vmax.f32 %v905, 0.0
  %v1354 = vmax.f32 %v912, 0.0
  %v1355 = vmax.f32 %v919, 0.0
  %v1356 = vmax.f32 %v926, 0.0
  %v1357 = vmax.f32 %v933, 0.0
  %v1358 = vmax.f32 %v936, 0.0
  %v1359 = vmax.f32 %v941, 0.0
  %v1360 = vmax.f32 %v944, 0.0
  %v1361 = vmax.f32 %v949, 0.0
  %v1362 = vmax.f32 %v952, 0.0
  %v1363 = vmax.f32 %v957, 0.0
  %v1364 = vmax.f32 %v960, 0.0
  %v1365 = vmax.f32 %v965, 0.0
  %v1366 = vmax.f32 %v968, 0.0
  %v1367 = vmax.f32 %v973, 0.0
  %v1368 = vmax.f32 %v976, 0.0
  %v1369 = vmax.f32 %v981, 0.0
  %v1370 = vmax.f32 %v984, 0.0
  %v1371 = vmax.f32 %v989, 0.0
  %v1372 = vmax.f32 %v992, 0.0
  %v1373 = vmax.f32 %v1003, 0.0
  %v1374 = vmax.f32 %v1010, 0.0
  %v1375 = vmax.f32 %v1017, 0.0
  %v1376 = vmax.f32 %v1024, 0.0
  %v1377 = vmax.f32 %v1031, 0.0
  %v1378 = vmax.f32 %v1038, 0.0
  %v1379 = vmax.f32 %v1045, 0.0
  %v1380 = vmax.f32 %v1052, 0.0
  %v1381 = vmax.f32 %v1065, 0.0
  %v1382 = vmax.f32 %v1068, 0.0
  %v1383 = vmax.f32 %v1073, 0.0
  %v1384 = vmax.f32 %v1076, 0.0
  %v1385 = vmax.f32 %v1081, 0.0
  %v1386 = vmax.f32 %v1084, 0.0
  %v1387 = vmax.f32 %v1089, 0.0
  %v1388 = vmax.f32 %v1092, 0.0
  %v1389 = vmax.f32 %v1097, 0.0
  %v1390 = vmax.f32 %v1100, 0.0
  %v1391 = vmax.f32 %v1105, 0.0
  %v1392 = vmax.f32 %v1108, 0.0
  %v1393 = vmax.f32 %v1113, 0.0
  %v1394 = vmax.f32 %v1116, 0.0
  %v1395 = vmax.f32 %v1121, 0.0
  %v1396 = vmax.f32 %v1124, 0.0
  %v1397 = vmax.f32 %v1129, 0.0
  %v1398 = vmax.f32 %v1132, 0.0
  %v1399 = vmax.f32 %v1137, 0.0
  %v1400 = vmax.f32 %v1144, 0.0
  %v1401 = vmax.f32 %v1151, 0.0
  %v1402 = vmax.f32 %v1158, 0.0
  %v1403 = vmax.f32 %v1165, 0.0
  %v1404 = vmax.f32 %v1172, 0.0
  %v1405 = vmax.f32 %v1179, 0.0
  %v1406 = vmax.f32 %v1186, 0.0
  %v1407 = vmax.f32 %v1193, 0.0
  %v1408 = vmax.f32 %v1200, 0.0
  %v1409 = vmax.f32 %v1203, 0.0
  %v1410 = vmax.f32 %v1208, 0.0
  %v1411 = vmax.f32 %v1211, 0.0
  %v1412 = vmax.f32 %v1216, 0.0
  %v1413 = vmax.f32 %v1219, 0.0
  %v1414 = vmax.f32 %v1224, 0.0
  %v1415 = vmax.f32 %v1227, 0.0
  %v1416 = vmax.f32 %v1232, 0.0
  %v1417 = vmax.f32 %v1235, 0.0
  %v1418 = vmax.f32 %v1240, 0.0
  %v1419 = vmax.f32 %v1243, 0.0
  %v1420 = vmax.f32 %v1248, 0.0
  %v1421 = vmax.f32 %v1251, 0.0
  %v1422 = vmax.f32 %v1256, 0.0
  %v1423 = vmax.f32 %v1259, 0.0
  %v1424 = vmax.f32 %v1270, 0.0
  %v1425 = vmax.f32 %v1277, 0.0
  %v1426 = vmax.f32 %v1284, 0.0
  %v1427 = vmax.f32 %v1291, 0.0
  %v1428 = vmax.f32 %v1298, 0.0
  %v1429 = vmax.f32 %v1305, 0.0
  %v1430 = vmax.f32 %v1312, 0.0
  %v1431 = vmax.f32 %v1319, 0.0
  %v1432 = vmin.f32 %v1330, 6.0
  %v1433 = vmin.f32 %v1331, 6.0
  %v1434 = vmin.f32 %v1332, 6.0
  %v1435 = vmin.f32 %v1333, 6.0
  %v1436 = vmin.f32 %v1334, 6.0
  %v1437 = vmin.f32 %v1335, 6.0
  %v1438 = vmin.f32 %v1336, 6.0
  %v1439 = vmin.f32 %v1337, 6.0
  %v1440 = vmin.f32 %v1338, 6.0
  %v1441 = vmin.f32 %v1339, 6.0
  %v1442 = vmin.f32 %v1340, 6.0
  %v1443 = vmin.f32 %v1341, 6.0
  %v1444 = vmin.f32 %v1342, 6.0
  %v1445 = vmin.f32 %v1343, 6.0
  %v1446 = vmin.f32 %v1344, 6.0
  %v1447 = vmin.f32 %v1345, 6.0
  %v1448 = vmin.f32 %v1346, 6.0
  %v1449 = vmin.f32 %v1347, 6.0
  %v1450 = vmin.f32 %v1348, 6.0
  %v1451 = vmin.f32 %v1349, 6.0
  %v1452 = vmin.f32 %v1350, 6.0
  %v1453 = vmin.f32 %v1351, 6.0
  %v1454 = vmin.f32 %v1352, 6.0
  %v1455 = vmin.f32 %v1353, 6.0
  %v1456 = vmin.f32 %v1354, 6.0
  %v1457 = vmin.f32 %v1355, 6.0
  %v1458 = vmin.f32 %v1356, 6.0
  %v1459 = vmin.f32 %v1357, 6.0
  %v1460 = vmin.f32 %v1358, 6.0
  %v1461 = vmin.f32 %v1359, 6.0
  %v1462 = vmin.f32 %v1360, 6.0
  %v1463 = vmin.f32 %v1361, 6.0
  %v1464 = vmin.f32 %v1362, 6.0
  %v1465 = vmin.f32 %v1363, 6.0
  %v1466 = vmin.f32 %v1364, 6.0
  %v1467 = vmin.f32 %v1365, 6.0
  %v1468 = vmin.f32 %v1366, 6.0
  %v1469 = vmin.f32 %v1367, 6.0
  %v1470 = vmin.f32 %v1368, 6.0
  %v1471 = vmin.f32 %v1369, 6.0
  %v1472 = vmin.f32 %v1370, 6.0
  %v1473 = vmin.f32 %v1371, 6.0
  %v1474 = vmin.f32 %v1372, 6.0
  %v1475 = vmin.f32 %v1373, 6.0
  %v1476 = vmin.f32 %v1374, 6.0
  %v1477 = vmin.f32 %v1375, 6.0
  %v1478 = vmin.f32 %v1376, 6.0
  %v1479 = vmin.f32 %v1377, 6.0
  %v1480 = vmin.f32 %v1378, 6.0
  %v1481 = vmin.f32 %v1379, 6.0
  %v1482 = vmin.f32 %v1380, 6.0
  %v1483 = vmin.f32 %v1381, 6.0
  %v1484 = vmin.f32 %v1382, 6.0
  %v1485 = vmin.f32 %v1383, 6.0
  %v1486 = vmin.f32 %v1384, 6.0
  %v1487 = vmin.f32 %v1385, 6.0
  %v1488 = vmin.f32 %v1386, 6.0
  %v1489 = vmin.f32 %v1387, 6.0
  %v1490 = vmin.f32 %v1388, 6.0
  %v1491 = vmin.f32 %v1389, 6.0
  %v1492 = vmin.f32 %v1390, 6.0
  %v1493 = vmin.f32 %v1391, 6.0
  %v1494 = vmin.f32 %v1392, 6.0
  %v1495 = vmin.f32 %v1393, 6.0
  %v1496 = vmin.f32 %v1394, 6.0
  %v1497 = vmin.f32 %v1395, 6.0
  %v1498 = vmin.f32 %v1396, 6.0
  %v1499 = vmin.f32 %v1397, 6.0
  %v1500 = vmin.f32 %v1398, 6.0
  %v1501 = vmin.f32 %v1399, 6.0
  %v1502 = vmin.f32 %v1400, 6.0
  %v1503 = vmin.f32 %v1401, 6.0
  %v1504 = vmin.f32 %v1402, 6.0
  %v1505 = vmin.f32 %v1403, 6.0
  %v1506 = vmin.f32 %v1404, 6.0
  %v1507 = vmin.f32 %v1405, 6.0
  %v1508 = vmin.f32 %v1406, 6.0
  %v1509 = vmin.f32 %v1407, 6.0
  %v1510 = vmin.f32 %v1408, 6.0
  %v1511 = vmin.f32 %v1409, 6.0
  %v1512 = vmin.f32 %v1410, 6.0
  %v1513 = vmin.f32 %v1411, 6.0
  %v1514 = vmin.f32 %v1412, 6.0
  %v1515 = vmin.f32 %v1413, 6.0
  %v1516 = vmin.f32 %v1414, 6.0
  %v1517 = vmin.f32 %v1415, 6.0
  %v1518 = vmin.f32 %v1416, 6.0
  %v1519 = vmin.f32 %v1417, 6.0
  %v1520 = vmin.f32 %v1418, 6.0
  %v1521 = vmin.f32 %v1419, 6.0
  %v1522 = vmin.f32 %v1420, 6.0
  %v1523 = vmin.f32 %v1421, 6.0
  %v1524 = vmin.f32 %v1422, 6.0
  %v1525 = vmin.f32 %v1423, 6.0
  %v1526 = vmin.f32 %v1424, 6.0
  %v1527 = vmin.f32 %v1425, 6.0
  %v1528 = vmin.f32 %v1426, 6.0
  %v1529 = vmin.f32 %v1427, 6.0
  %v1530 = vmin.f32 %v1428, 6.0
  %v1531 = vmin.f32 %v1429, 6.0
  %v1532 = vmin.f32 %v1430, 6.0
  %v1533 = vmin.f32 %v1431, 6.0
  %v1534 = vld [vmem:[%s1] sm:$0xff]
  %v1535 = vld [vmem:[%s1 + $0x8] sm:$0xff]
  %v1536 = vld [vmem:[%s1 + $0x10] sm:$0xff]
  %v1537 = vld [vmem:[%s1 + $0x18] sm:$0xff]
  %v1538 = vld [vmem:[%s1 + $0x20] sm:$0xff]
  %v1539 = vld [vmem:[%s1 + $0x28] sm:$0xff]
  %v1540 = vld [vmem:[%s1 + $0x30] sm:$0xff]
  %v1541 = vld [vmem:[%s1 + $0x38] sm:$0xff]
  %v1542 = vld [vmem:[%s1 + $0x40] sm:$0xff]
  %v1543 = vld [vmem:[%s1 + $0x48] sm:$0xff]
  %v1544 = vld [vmem:[%s1 + $0x50] sm:$0xff]
  %v1545 = vld [vmem:[%s1 + $0x58] sm:$0xff]
  %v1546 = vld [vmem:[%s1 + $0x60] sm:$0xff]
  %v1547 = vld [vmem:[%s1 + $0x68] sm:$0xff]
  %v1548 = vld [vmem:[%s1 + $0x70] sm:$0xff]
  %v1549 = vld [vmem:[%s1 + $0x78] sm:$0xff]
  %v1550 = vld [vmem:[%s1 + $0x80] sm:$0xff]
  %v1551 = vld [vmem:[%s1 + $0x88] sm:$0xff]
  %v1552 = vld [vmem:[%s1 + $0x90] sm:$0xff]
  %v1553 = vld [vmem:[%s1 + $0xa0] sm:$0xff]
  %v1554 = vld [vmem:[%s1 + $0xb0] sm:$0xff]
  %v1555 = vld [vmem:[%s1 + $0xc0] sm:$0xff]
  %v1556 = vld [vmem:[%s1 + $0xd0] sm:$0xff]
  %v1557 = vld [vmem:[%s1 + $0xe0] sm:$0xff]
  %v1558 = vld [vmem:[%s1 + $0xf0] sm:$0xff]
  %v1559 = vld [vmem:[%s1 + $0x100] sm:$0xff]
  %v1560 = vld [vmem:[%s1 + $0x110] sm:$0xff]
  %v1561 = vld [vmem:[%s1 + $0x120] sm:$0xff]
  %v1562 = vld [vmem:[%s1 + $0x128] sm:$0xff]
  %v1563 = vld [vmem:[%s1 + $0x130] sm:$0xff]
  %v1564 = vld [vmem:[%s1 + $0x138] sm:$0xff]
  %v1565 = vld [vmem:[%s1 + $0x140] sm:$0xff]
  %v1566 = vld [vmem:[%s1 + $0x148] sm:$0xff]
  %v1567 = vld [vmem:[%s1 + $0x150] sm:$0xff]
  %v1568 = vld [vmem:[%s1 + $0x158] sm:$0xff]
  %v1569 = vld [vmem:[%s1 + $0x160] sm:$0xff]
  %v1570 = vld [vmem:[%s1 + $0x168] sm:$0xff]
  %v1571 = vld [vmem:[%s1 + $0x170] sm:$0xff]
  %v1572 = vld [vmem:[%s1 + $0x178] sm:$0xff]
  %v1573 = vld [vmem:[%s1 + $0x180] sm:$0xff]
  %v1574 = vld [vmem:[%s1 + $0x188] sm:$0xff]
  %v1575 = vld [vmem:[%s1 + $0x190] sm:$0xff]
  %v1576 = vld [vmem:[%s1 + $0x198] sm:$0xff]
  %v1577 = vld [vmem:[%s1 + $0x1b0] sm:$0xff]
  %v1578 = vld [vmem:[%s1 + $0x1c0] sm:$0xff]
  %v1579 = vld [vmem:[%s1 + $0x1d0] sm:$0xff]
  %v1580 = vld [vmem:[%s1 + $0x1e0] sm:$0xff]
  %v1581 = vld [vmem:[%s1 + $0x1f0] sm:$0xff]
  %v1582 = vld [vmem:[%s1 + $0x200] sm:$0xff]
  %v1583 = vld [vmem:[%s1 + $0x210] sm:$0xff]
  %v1584 = vld [vmem:[%s1 + $0x220] sm:$0xff]
  %1586 = vset.pattern.permute.xlu0 0
  %1587 = vperm.xlu0 %1586, %v1534
  %v1588 = vpop.permute.xlu0 %1587
  %1591 = vset.pattern.permute.xlu0 0
  %1592 = vperm.xlu0 %1591, %v1535
  %v1593 = vpop.permute.xlu0 %1592
  %1596 = vset.pattern.permute.xlu0 0
  %1597 = vperm.xlu0 %1596, %v1536
  %v1598 = vpop.permute.xlu0 %1597
  %1601 = vset.pattern.permute.xlu0 0
  %1602 = vperm.xlu0 %1601, %v1537
  %v1603 = vpop.permute.xlu0 %1602
  %1606 = vset.pattern.permute.xlu0 0
  %1607 = vperm.xlu0 %1606, %v1538
  %v1608 = vpop.permute.xlu0 %1607
  %1611 = vset.pattern.permute.xlu0 0
  %1612 = vperm.xlu0 %1611, %v1539
  %v1613 = vpop.permute.xlu0 %1612
  %1616 = vset.pattern.permute.xlu0 0
  %1617 = vperm.xlu0 %1616, %v1540
  %v1618 = vpop.permute.xlu0 %1617
  %1621 = vset.pattern.permute.xlu0 0
  %1622 = vperm.xlu0 %1621, %v1541
  %v1623 = vpop.permute.xlu0 %1622
  %1626 = vset.pattern.permute.xlu0 0
  %1627 = vperm.xlu0 %1626, %v1542
  %v1628 = vpop.permute.xlu0 %1627
  %1631 = vset.pattern.permute.xlu0 0
  %1632 = vperm.xlu0 %1631, %v1543
  %v1633 = vpop.permute.xlu0 %1632
  %1636 = vset.pattern.permute.xlu0 0
  %1637 = vperm.xlu0 %1636, %v1544
  %v1638 = vpop.permute.xlu0 %1637
  %1641 = vset.pattern.permute.xlu0 0
  %1642 = vperm.xlu0 %1641, %v1545
  %v1643 = vpop.permute.xlu0 %1642
  %1646 = vset.pattern.permute.xlu0 0
  %1647 = vperm.xlu0 %1646, %v1546
  %v1648 = vpop.permute.xlu0 %1647
  %1651 = vset.pattern.permute.xlu0 0
  %1652 = vperm.xlu0 %1651, %v1547
  %v1653 = vpop.permute.xlu0 %1652
  %1656 = vset.pattern.permute.xlu0 0
  %1657 = vperm.xlu0 %1656, %v1548
  %v1658 = vpop.permute.xlu0 %1657
  %1661 = vset.pattern.permute.xlu0 0
  %1662 = vperm.xlu0 %1661, %v1549
  %v1663 = vpop.permute.xlu0 %1662
  %1666 = vset.pattern.permute.xlu0 0
  %1667 = vperm.xlu0 %1666, %v1550
  %v1668 = vpop.permute.xlu0 %1667
  %1671 = vset.pattern.permute.xlu0 0
  %1672 = vperm.xlu0 %1671, %v1551
  %v1673 = vpop.permute.xlu0 %1672
  %1676 = vset.pattern.permute.xlu0 0
  %1677 = vperm.xlu0 %1676, %v1552
  %v1678 = vpop.permute.xlu0 %1677
  %1681 = vset.pattern.permute.xlu0 0
  %1682 = vperm.xlu0 %1681, %v1553
  %v1683 = vpop.permute.xlu0 %1682
  %1686 = vset.pattern.permute.xlu0 0
  %1687 = vperm.xlu0 %1686, %v1554
  %v1688 = vpop.permute.xlu0 %1687
  %1691 = vset.pattern.permute.xlu0 0
  %1692 = vperm.xlu0 %1691, %v1555
  %v1693 = vpop.permute.xlu0 %1692
  %1696 = vset.pattern.permute.xlu0 0
  %1697 = vperm.xlu0 %1696, %v1556
  %v1698 = vpop.permute.xlu0 %1697
  %1701 = vset.pattern.permute.xlu0 0
  %1702 = vperm.xlu0 %1701, %v1557
  %v1703 = vpop.permute.xlu0 %1702
  %1706 = vset.pattern.permute.xlu0 0
  %1707 = vperm.xlu0 %1706, %v1558
  %v1708 = vpop.permute.xlu0 %1707
  %1711 = vset.pattern.permute.xlu0 0
  %1712 = vperm.xlu0 %1711, %v1559
  %v1713 = vpop.permute.xlu0 %1712
  %1716 = vset.pattern.permute.xlu0 0
  %1717 = vperm.xlu0 %1716, %v1560
  %v1718 = vpop.permute.xlu0 %1717
  %1721 = vset.pattern.permute.xlu0 0
  %1722 = vperm.xlu0 %1721, %v1561
  %v1723 = vpop.permute.xlu0 %1722
  %1726 = vset.pattern.permute.xlu0 0
  %1727 = vperm.xlu0 %1726, %v1562
  %v1728 = vpop.permute.xlu0 %1727
  %1731 = vset.pattern.permute.xlu0 0
  %1732 = vperm.xlu0 %1731, %v1563
  %v1733 = vpop.permute.xlu0 %1732
  %1736 = vset.pattern.permute.xlu0 0
  %1737 = vperm.xlu0 %1736, %v1564
  %v1738 = vpop.permute.xlu0 %1737
  %1741 = vset.pattern.permute.xlu0 0
  %1742 = vperm.xlu0 %1741, %v1565
  %v1743 = vpop.permute.xlu0 %1742
  %1746 = vset.pattern.permute.xlu0 0
  %1747 = vperm.xlu0 %1746, %v1566
  %v1748 = vpop.permute.xlu0 %1747
  %1751 = vset.pattern.permute.xlu0 0
  %1752 = vperm.xlu0 %1751, %v1567
  %v1753 = vpop.permute.xlu0 %1752
  %1756 = vset.pattern.permute.xlu0 0
  %1757 = vperm.xlu0 %1756, %v1568
  %v1758 = vpop.permute.xlu0 %1757
  %1761 = vset.pattern.permute.xlu0 0
  %1762 = vperm.xlu0 %1761, %v1569
  %v1763 = vpop.permute.xlu0 %1762
  %1766 = vset.pattern.permute.xlu0 0
  %1767 = vperm.xlu0 %1766, %v1570
  %v1768 = vpop.permute.xlu0 %1767
  %1771 = vset.pattern.permute.xlu0 0
  %1772 = vperm.xlu0 %1771, %v1571
  %v1773 = vpop.permute.xlu0 %1772
  %1776 = vset.pattern.permute.xlu0 0
  %1777 = vperm.xlu0 %1776, %v1572
  %v1778 = vpop.permute.xlu0 %1777
  %1781 = vset.pattern.permute.xlu0 0
  %1782 = vperm.xlu0 %1781, %v1573
  %v1783 = vpop.permute.xlu0 %1782
  %1786 = vset.pattern.permute.xlu0 0
  %1787 = vperm.xlu0 %1786, %v1574
  %v1788 = vpop.permute.xlu0 %1787
  %1791 = vset.pattern.permute.xlu0 0
  %1792 = vperm.xlu0 %1791, %v1575
  %v1793 = vpop.permute.xlu0 %1792
  %1796 = vset.pattern.permute.xlu0 0
  %1797 = vperm.xlu0 %1796, %v1576
  %v1798 = vpop.permute.xlu0 %1797
  %1801 = vset.pattern.permute.xlu0 0
  %1802 = vperm.xlu0 %1801, %v1577
  %v1803 = vpop.permute.xlu0 %1802
  %1806 = vset.pattern.permute.xlu0 0
  %1807 = vperm.xlu0 %1806, %v1578
  %v1808 = vpop.permute.xlu0 %1807
  %1811 = vset.pattern.permute.xlu0 0
  %1812 = vperm.xlu0 %1811, %v1579
  %v1813 = vpop.permute.xlu0 %1812
  %1816 = vset.pattern.permute.xlu0 0
  %1817 = vperm.xlu0 %1816, %v1580
  %v1818 = vpop.permute.xlu0 %1817
  %1821 = vset.pattern.permute.xlu0 0
  %1822 = vperm.xlu0 %1821, %v1581
  %v1823 = vpop.permute.xlu0 %1822
  %1826 = vset.pattern.permute.xlu0 0
  %1827 = vperm.xlu0 %1826, %v1582
  %v1828 = vpop.permute.xlu0 %1827
  %1831 = vset.pattern.permute.xlu0 0
  %1832 = vperm.xlu0 %1831, %v1583
  %v1833 = vpop.permute.xlu0 %1832
  %1836 = vset.pattern.permute.xlu0 0
  %1837 = vperm.xlu0 %1836, %v1584
  %v1838 = vpop.permute.xlu0 %1837
  %v1840 = vmul.f32 %v1432, %v1588
  %v1841 = vmul.f32 %v1433, %v1593
  %v1842 = vmul.f32 %v1434, %v1598
  %v1843 = vmul.f32 %v1435, %v1603
  %v1844 = vmul.f32 %v1436, %v1608
  %v1845 = vmul.f32 %v1437, %v1613
  %v1846 = vmul.f32 %v1438, %v1618
  %v1847 = vmul.f32 %v1439, %v1623
  %v1848 = vmul.f32 %v1440, %v1628
  %v1849 = vmul.f32 %v1441, %v1633
  %v1850 = vmul.f32 %v1442, %v1638
  %v1851 = vmul.f32 %v1443, %v1643
  %v1852 = vmul.f32 %v1444, %v1648
  %v1853 = vmul.f32 %v1445, %v1653
  %v1854 = vmul.f32 %v1446, %v1658
  %v1855 = vmul.f32 %v1447, %v1663
  %v1856 = vmul.f32 %v1448, %v1668
  %v1857 = vmul.f32 %v1449, %v1673
  %v1858 = vmul.f32 %v1450, %v1678
  %v1859 = vmul.f32 %v1451, %v1683
  %v1860 = vmul.f32 %v1452, %v1688
  %v1861 = vmul.f32 %v1453, %v1693
  %v1862 = vmul.f32 %v1454, %v1698
  %v1863 = vmul.f32 %v1455, %v1703
  %v1864 = vmul.f32 %v1456, %v1708
  %v1865 = vmul.f32 %v1457, %v1713
  %v1866 = vmul.f32 %v1458, %v1718
  %v1867 = vmul.f32 %v1459, %v1723
  %v1868 = vmul.f32 %v1460, %v1728
  %v1869 = vmul.f32 %v1461, %v1733
  %v1870 = vmul.f32 %v1462, %v1738
  %v1871 = vmul.f32 %v1463, %v1743
  %v1872 = vmul.f32 %v1464, %v1748
  %v1873 = vmul.f32 %v1465, %v1753
  %v1874 = vmul.f32 %v1466, %v1758
  %v1875 = vmul.f32 %v1467, %v1763
  %v1876 = vmul.f32 %v1468, %v1768
  %v1877 = vmul.f32 %v1469, %v1773
  %v1878 = vmul.f32 %v1470, %v1778
  %v1879 = vmul.f32 %v1471, %v1783
  %v1880 = vmul.f32 %v1472, %v1788
  %v1881 = vmul.f32 %v1473, %v1793
  %v1882 = vmul.f32 %v1474, %v1798
  %v1883 = vmul.f32 %v1475, %v1803
  %v1884 = vmul.f32 %v1476, %v1808
  %v1885 = vmul.f32 %v1477, %v1813
  %v1886 = vmul.f32 %v1478, %v1818
  %v1887 = vmul.f32 %v1479, %v1823
  %v1888 = vmul.f32 %v1480, %v1828
  %v1889 = vmul.f32 %v1481, %v1833
  %v1890 = vmul.f32 %v1482, %v1838
  %v1891 = vmul.f32 %v1483, %v1588
  %v1892 = vmul.f32 %v1484, %v1593
  %v1893 = vmul.f32 %v1485, %v1598
  %v1894 = vmul.f32 %v1486, %v1603
  %v1895 = vmul.f32 %v1487, %v1608
  %v1896 = vmul.f32 %v1488, %v1613
  %v1897 = vmul.f32 %v1489, %v1618
  %v1898 = vmul.f32 %v1490, %v1623
  %v1899 = vmul.f32 %v1491, %v1628
  %v1900 = vmul.f32 %v1492, %v1633
  %v1901 = vmul.f32 %v1493, %v1638
  %v1902 = vmul.f32 %v1494, %v1643
  %v1903 = vmul.f32 %v1495, %v1648
  %v1904 = vmul.f32 %v1496, %v1653
  %v1905 = vmul.f32 %v1497, %v1658
  %v1906 = vmul.f32 %v1498, %v1663
  %v1907 = vmul.f32 %v1499, %v1668
  %v1908 = vmul.f32 %v1500, %v1673
  %v1909 = vmul.f32 %v1501, %v1678
  %v1910 = vmul.f32 %v1502, %v1683
  %v1911 = vmul.f32 %v1503, %v1688
  %v1912 = vmul.f32 %v1504, %v1693
  %v1913 = vmul.f32 %v1505, %v1698
  %v1914 = vmul.f32 %v1506, %v1703
  %v1915 = vmul.f32 %v1507, %v1708
  %v1916 = vmul.f32 %v1508, %v1713
  %v1917 = vmul.f32 %v1509, %v1718
  %v1918 = vmul.f32 %v1510, %v1723
  %v1919 = vmul.f32 %v1511, %v1728
  %v1920 = vmul.f32 %v1512, %v1733
  %v1921 = vmul.f32 %v1513, %v1738
  %v1922 = vmul.f32 %v1514, %v1743
  %v1923 = vmul.f32 %v1515, %v1748
  %v1924 = vmul.f32 %v1516, %v1753
  %v1925 = vmul.f32 %v1517, %v1758
  %v1926 = vmul.f32 %v1518, %v1763
  %v1927 = vmul.f32 %v1519, %v1768
  %v1928 = vmul.f32 %v1520, %v1773
  %v1929 = vmul.f32 %v1521, %v1778
  %v1930 = vmul.f32 %v1522, %v1783
  %v1931 = vmul.f32 %v1523, %v1788
  %v1932 = vmul.f32 %v1524, %v1793
  %v1933 = vmul.f32 %v1525, %v1798
  %v1934 = vmul.f32 %v1526, %v1803
  %v1935 = vmul.f32 %v1527, %v1808
  %v1936 = vmul.f32 %v1528, %v1813
  %v1937 = vmul.f32 %v1529, %v1818
  %v1938 = vmul.f32 %v1530, %v1823
  %v1939 = vmul.f32 %v1531, %v1828
  %v1940 = vmul.f32 %v1532, %v1833
  %v1941 = vmul.f32 %v1533, %v1838
  %v1942 = vld [vmem:[%s4] sm:$0x1]
  %v1943 = vld [vmem:[%s4 + $0x1] sm:$0x1]
  %v1944 = vld [vmem:[%s4 + $0x2] sm:$0x1]
  %v1945 = vld [vmem:[%s4 + $0x3] sm:$0x1]
  %v1946 = vld [vmem:[%s4 + $0x4] sm:$0x1]
  %v1947 = vld [vmem:[%s4 + $0x5] sm:$0x1]
  %v1948 = vld [vmem:[%s4 + $0x6] sm:$0x1]
  %v1949 = vld [vmem:[%s4 + $0x7] sm:$0x1]
  %v1950 = vld [vmem:[%s4 + $0x8] sm:$0x1]
  %v1952 = vlaneseq
  %v1953 = vshrl.u32 %v1952, 7
  %v1954 = vsub.s32 0, %v1953
  %v1955 = vrot.slane %v1942, %v1954
  %v1957 = vmul.f32 %v1840, %v1955
  %v1958 = vmul.f32 %v1842, %v1955
  %v1959 = vmul.f32 %v1844, %v1955
  %v1960 = vmul.f32 %v1846, %v1955
  %v1961 = vmul.f32 %v1848, %v1955
  %v1962 = vmul.f32 %v1850, %v1955
  %v1963 = vmul.f32 %v1852, %v1955
  %v1964 = vmul.f32 %v1854, %v1955
  %v1965 = vmul.f32 %v1891, %v1955
  %v1966 = vmul.f32 %v1893, %v1955
  %v1967 = vmul.f32 %v1895, %v1955
  %v1968 = vmul.f32 %v1897, %v1955
  %v1969 = vmul.f32 %v1899, %v1955
  %v1970 = vmul.f32 %v1901, %v1955
  %v1971 = vmul.f32 %v1903, %v1955
  %v1972 = vmul.f32 %v1905, %v1955
  %v1974 = vlaneseq
  %v1975 = vshrl.u32 %v1974, 7
  %v1976 = vsub.s32 0, %v1975
  %v1977 = vrot.slane %v1943, %v1976
  %v1979 = vmul.f32 %v1858, %v1977
  %v1980 = vmul.f32 %v1859, %v1977
  %v1981 = vmul.f32 %v1860, %v1977
  %v1982 = vmul.f32 %v1861, %v1977
  %v1983 = vmul.f32 %v1862, %v1977
  %v1984 = vmul.f32 %v1863, %v1977
  %v1985 = vmul.f32 %v1864, %v1977
  %v1986 = vmul.f32 %v1865, %v1977
  %v1987 = vmul.f32 %v1909, %v1977
  %v1988 = vmul.f32 %v1910, %v1977
  %v1989 = vmul.f32 %v1911, %v1977
  %v1990 = vmul.f32 %v1912, %v1977
  %v1991 = vmul.f32 %v1913, %v1977
  %v1992 = vmul.f32 %v1914, %v1977
  %v1993 = vmul.f32 %v1915, %v1977
  %v1994 = vmul.f32 %v1916, %v1977
  %v1995 = vadd.f32 %v1957, %v1979
  %v1996 = vadd.f32 %v1958, %v1980
  %v1997 = vadd.f32 %v1959, %v1981
  %v1998 = vadd.f32 %v1960, %v1982
  %v1999 = vadd.f32 %v1961, %v1983
  %v2000 = vadd.f32 %v1962, %v1984
  %v2001 = vadd.f32 %v1963, %v1985
  %v2002 = vadd.f32 %v1964, %v1986
  %v2003 = vadd.f32 %v1965, %v1987
  %v2004 = vadd.f32 %v1966, %v1988
  %v2005 = vadd.f32 %v1967, %v1989
  %v2006 = vadd.f32 %v1968, %v1990
  %v2007 = vadd.f32 %v1969, %v1991
  %v2008 = vadd.f32 %v1970, %v1992
  %v2009 = vadd.f32 %v1971, %v1993
  %v2010 = vadd.f32 %v1972, %v1994
  %v2012 = vlaneseq
  %v2013 = vshrl.u32 %v2012, 7
  %v2014 = vsub.s32 0, %v2013
  %v2015 = vrot.slane %v1944, %v2014
  %v2017 = vmul.f32 %v1840, %v2015
  %v2018 = vmul.f32 %v1841, %v2015
  %v2019 = vmul.f32 %v1842, %v2015
  %v2020 = vmul.f32 %v1843, %v2015
  %v2021 = vmul.f32 %v1844, %v2015
  %v2022 = vmul.f32 %v1845, %v2015
  %v2023 = vmul.f32 %v1846, %v2015
  %v2024 = vmul.f32 %v1847, %v2015
  %v2025 = vmul.f32 %v1848, %v2015
  %v2026 = vmul.f32 %v1849, %v2015
  %v2027 = vmul.f32 %v1850, %v2015
  %v2028 = vmul.f32 %v1851, %v2015
  %v2029 = vmul.f32 %v1852, %v2015
  %v2030 = vmul.f32 %v1853, %v2015
  %v2031 = vmul.f32 %v1854, %v2015
  %v2032 = vmul.f32 %v1855, %v2015
  %v2033 = vmul.f32 %v1891, %v2015
  %v2034 = vmul.f32 %v1892, %v2015
  %v2035 = vmul.f32 %v1893, %v2015
  %v2036 = vmul.f32 %v1894, %v2015
  %v2037 = vmul.f32 %v1895, %v2015
  %v2038 = vmul.f32 %v1896, %v2015
  %v2039 = vmul.f32 %v1897, %v2015
  %v2040 = vmul.f32 %v1898, %v2015
  %v2041 = vmul.f32 %v1899, %v2015
  %v2042 = vmul.f32 %v1900, %v2015
  %v2043 = vmul.f32 %v1901, %v2015
  %v2044 = vmul.f32 %v1902, %v2015
  %v2045 = vmul.f32 %v1903, %v2015
  %v2046 = vmul.f32 %v1904, %v2015
  %v2047 = vmul.f32 %v1905, %v2015
  %v2048 = vmul.f32 %v1906, %v2015
  %vm2081 = vcmask 1046528
  %v2082 = vrot.slane %v2017, 1
  %v2083 = vrot.slane %v2018, 1
  %v2084 = vsel %vm2081, %v2082, %v2083
  %v2085 = vrot.slane %v2019, 1
  %v2086 = vrot.slane %v2020, 1
  %v2087 = vsel %vm2081, %v2085, %v2086
  %v2088 = vrot.slane %v2021, 1
  %v2089 = vrot.slane %v2022, 1
  %v2090 = vsel %vm2081, %v2088, %v2089
  %v2091 = vrot.slane %v2023, 1
  %v2092 = vrot.slane %v2024, 1
  %v2093 = vsel %vm2081, %v2091, %v2092
  %v2094 = vrot.slane %v2025, 1
  %v2095 = vrot.slane %v2026, 1
  %v2096 = vsel %vm2081, %v2094, %v2095
  %v2097 = vrot.slane %v2027, 1
  %v2098 = vrot.slane %v2028, 1
  %v2099 = vsel %vm2081, %v2097, %v2098
  %v2100 = vrot.slane %v2029, 1
  %v2101 = vrot.slane %v2030, 1
  %v2102 = vsel %vm2081, %v2100, %v2101
  %v2103 = vrot.slane %v2031, 1
  %v2104 = vrot.slane %v2032, 1
  %v2105 = vsel %vm2081, %v2103, %v2104
  %v2106 = vrot.slane %v2033, 1
  %v2107 = vrot.slane %v2034, 1
  %v2108 = vsel %vm2081, %v2106, %v2107
  %v2109 = vrot.slane %v2035, 1
  %v2110 = vrot.slane %v2036, 1
  %v2111 = vsel %vm2081, %v2109, %v2110
  %v2112 = vrot.slane %v2037, 1
  %v2113 = vrot.slane %v2038, 1
  %v2114 = vsel %vm2081, %v2112, %v2113
  %v2115 = vrot.slane %v2039, 1
  %v2116 = vrot.slane %v2040, 1
  %v2117 = vsel %vm2081, %v2115, %v2116
  %v2118 = vrot.slane %v2041, 1
  %v2119 = vrot.slane %v2042, 1
  %v2120 = vsel %vm2081, %v2118, %v2119
  %v2121 = vrot.slane %v2043, 1
  %v2122 = vrot.slane %v2044, 1
  %v2123 = vsel %vm2081, %v2121, %v2122
  %v2124 = vrot.slane %v2045, 1
  %v2125 = vrot.slane %v2046, 1
  %v2126 = vsel %vm2081, %v2124, %v2125
  %v2127 = vrot.slane %v2047, 1
  %v2128 = vrot.slane %v2048, 1
  %v2129 = vsel %vm2081, %v2127, %v2128
  %v2146 = vadd.f32 %v1995, %v2084
  %v2147 = vadd.f32 %v1996, %v2087
  %v2148 = vadd.f32 %v1997, %v2090
  %v2149 = vadd.f32 %v1998, %v2093
  %v2150 = vadd.f32 %v1999, %v2096
  %v2151 = vadd.f32 %v2000, %v2099
  %v2152 = vadd.f32 %v2001, %v2102
  %v2153 = vadd.f32 %v2002, %v2105
  %v2154 = vadd.f32 %v2003, %v2108
  %v2155 = vadd.f32 %v2004, %v2111
  %v2156 = vadd.f32 %v2005, %v2114
  %v2157 = vadd.f32 %v2006, %v2117
  %v2158 = vadd.f32 %v2007, %v2120
  %v2159 = vadd.f32 %v2008, %v2123
  %v2160 = vadd.f32 %v2009, %v2126
  %v2161 = vadd.f32 %v2010, %v2129
  %v2163 = vlaneseq
  %v2164 = vshrl.u32 %v2163, 7
  %v2165 = vsub.s32 0, %v2164
  %v2166 = vrot.slane %v1945, %v2165
  %v2168 = vmul.f32 %v1867, %v2166
  %v2169 = vmul.f32 %v1869, %v2166
  %v2170 = vmul.f32 %v1871, %v2166
  %v2171 = vmul.f32 %v1873, %v2166
  %v2172 = vmul.f32 %v1875, %v2166
  %v2173 = vmul.f32 %v1877, %v2166
  %v2174 = vmul.f32 %v1879, %v2166
  %v2175 = vmul.f32 %v1881, %v2166
  %v2176 = vmul.f32 %v1918, %v2166
  %v2177 = vmul.f32 %v1920, %v2166
  %v2178 = vmul.f32 %v1922, %v2166
  %v2179 = vmul.f32 %v1924, %v2166
  %v2180 = vmul.f32 %v1926, %v2166
  %v2181 = vmul.f32 %v1928, %v2166
  %v2182 = vmul.f32 %v1930, %v2166
  %v2183 = vmul.f32 %v1932, %v2166
  %v2184 = vadd.f32 %v2146, %v2168
  %v2185 = vadd.f32 %v2147, %v2169
  %v2186 = vadd.f32 %v2148, %v2170
  %v2187 = vadd.f32 %v2149, %v2171
  %v2188 = vadd.f32 %v2150, %v2172
  %v2189 = vadd.f32 %v2151, %v2173
  %v2190 = vadd.f32 %v2152, %v2174
  %v2191 = vadd.f32 %v2153, %v2175
  %v2192 = vadd.f32 %v2154, %v2176
  %v2193 = vadd.f32 %v2155, %v2177
  %v2194 = vadd.f32 %v2156, %v2178
  %v2195 = vadd.f32 %v2157, %v2179
  %v2196 = vadd.f32 %v2158, %v2180
  %v2197 = vadd.f32 %v2159, %v2181
  %v2198 = vadd.f32 %v2160, %v2182
  %v2199 = vadd.f32 %v2161, %v2183
  %v2201 = vlaneseq
  %v2202 = vshrl.u32 %v2201, 7
  %v2203 = vsub.s32 0, %v2202
  %v2204 = vrot.slane %v1946, %v2203
  %v2206 = vmul.f32 %v1883, %v2204
  %v2207 = vmul.f32 %v1884, %v2204
  %v2208 = vmul.f32 %v1885, %v2204
  %v2209 = vmul.f32 %v1886, %v2204
  %v2210 = vmul.f32 %v1887, %v2204
  %v2211 = vmul.f32 %v1888, %v2204
  %v2212 = vmul.f32 %v1889, %v2204
  %v2213 = vmul.f32 %v1890, %v2204
  %v2214 = vmul.f32 %v1934, %v2204
  %v2215 = vmul.f32 %v1935, %v2204
  %v2216 = vmul.f32 %v1936, %v2204
  %v2217 = vmul.f32 %v1937, %v2204
  %v2218 = vmul.f32 %v1938, %v2204
  %v2219 = vmul.f32 %v1939, %v2204
  %v2220 = vmul.f32 %v1940, %v2204
  %v2221 = vmul.f32 %v1941, %v2204
  %v2222 = vadd.f32 %v2184, %v2206
  %v2223 = vadd.f32 %v2185, %v2207
  %v2224 = vadd.f32 %v2186, %v2208
  %v2225 = vadd.f32 %v2187, %v2209
  %v2226 = vadd.f32 %v2188, %v2210
  %v2227 = vadd.f32 %v2189, %v2211
  %v2228 = vadd.f32 %v2190, %v2212
  %v2229 = vadd.f32 %v2191, %v2213
  %v2230 = vadd.f32 %v2192, %v2214
  %v2231 = vadd.f32 %v2193, %v2215
  %v2232 = vadd.f32 %v2194, %v2216
  %v2233 = vadd.f32 %v2195, %v2217
  %v2234 = vadd.f32 %v2196, %v2218
  %v2235 = vadd.f32 %v2197, %v2219
  %v2236 = vadd.f32 %v2198, %v2220
  %v2237 = vadd.f32 %v2199, %v2221
  %v2239 = vlaneseq
  %v2240 = vshrl.u32 %v2239, 7
  %v2241 = vsub.s32 0, %v2240
  %v2242 = vrot.slane %v1947, %v2241
  %v2244 = vmul.f32 %v1867, %v2242
  %v2245 = vmul.f32 %v1868, %v2242
  %v2246 = vmul.f32 %v1869, %v2242
  %v2247 = vmul.f32 %v1870, %v2242
  %v2248 = vmul.f32 %v1871, %v2242
  %v2249 = vmul.f32 %v1872, %v2242
  %v2250 = vmul.f32 %v1873, %v2242
  %v2251 = vmul.f32 %v1874, %v2242
  %v2252 = vmul.f32 %v1875, %v2242
  %v2253 = vmul.f32 %v1876, %v2242
  %v2254 = vmul.f32 %v1877, %v2242
  %v2255 = vmul.f32 %v1878, %v2242
  %v2256 = vmul.f32 %v1879, %v2242
  %v2257 = vmul.f32 %v1880, %v2242
  %v2258 = vmul.f32 %v1881, %v2242
  %v2259 = vmul.f32 %v1882, %v2242
  %v2260 = vmul.f32 %v1918, %v2242
  %v2261 = vmul.f32 %v1919, %v2242
  %v2262 = vmul.f32 %v1920, %v2242
  %v2263 = vmul.f32 %v1921, %v2242
  %v2264 = vmul.f32 %v1922, %v2242
  %v2265 = vmul.f32 %v1923, %v2242
  %v2266 = vmul.f32 %v1924, %v2242
  %v2267 = vmul.f32 %v1925, %v2242
  %v2268 = vmul.f32 %v1926, %v2242
  %v2269 = vmul.f32 %v1927, %v2242
  %v2270 = vmul.f32 %v1928, %v2242
  %v2271 = vmul.f32 %v1929, %v2242
  %v2272 = vmul.f32 %v1930, %v2242
  %v2273 = vmul.f32 %v1931, %v2242
  %v2274 = vmul.f32 %v1932, %v2242
  %v2275 = vmul.f32 %v1933, %v2242
  %v2308 = vrot.slane %v2244, 1
  %v2309 = vrot.slane %v2245, 1
  %v2310 = vsel %vm2081, %v2308, %v2309
  %v2311 = vrot.slane %v2246, 1
  %v2312 = vrot.slane %v2247, 1
  %v2313 = vsel %vm2081, %v2311, %v2312
  %v2314 = vrot.slane %v2248, 1
  %v2315 = vrot.slane %v2249, 1
  %v2316 = vsel %vm2081, %v2314, %v2315
  %v2317 = vrot.slane %v2250, 1
  %v2318 = vrot.slane %v2251, 1
  %v2319 = vsel %vm2081, %v2317, %v2318
  %v2320 = vrot.slane %v2252, 1
  %v2321 = vrot.slane %v2253, 1
  %v2322 = vsel %vm2081, %v2320, %v2321
  %v2323 = vrot.slane %v2254, 1
  %v2324 = vrot.slane %v2255, 1
  %v2325 = vsel %vm2081, %v2323, %v2324
  %v2326 = vrot.slane %v2256, 1
  %v2327 = vrot.slane %v2257, 1
  %v2328 = vsel %vm2081, %v2326, %v2327
  %v2329 = vrot.slane %v2258, 1
  %v2330 = vrot.slane %v2259, 1
  %v2331 = vsel %vm2081, %v2329, %v2330
  %v2332 = vrot.slane %v2260, 1
  %v2333 = vrot.slane %v2261, 1
  %v2334 = vsel %vm2081, %v2332, %v2333
  %v2335 = vrot.slane %v2262, 1
  %v2336 = vrot.slane %v2263, 1
  %v2337 = vsel %vm2081, %v2335, %v2336
  %v2338 = vrot.slane %v2264, 1
  %v2339 = vrot.slane %v2265, 1
  %v2340 = vsel %vm2081, %v2338, %v2339
  %v2341 = vrot.slane %v2266, 1
  %v2342 = vrot.slane %v2267, 1
  %v2343 = vsel %vm2081, %v2341, %v2342
  %v2344 = vrot.slane %v2268, 1
  %v2345 = vrot.slane %v2269, 1
  %v2346 = vsel %vm2081, %v2344, %v2345
  %v2347 = vrot.slane %v2270, 1
  %v2348 = vrot.slane %v2271, 1
  %v2349 = vsel %vm2081, %v2347, %v2348
  %v2350 = vrot.slane %v2272, 1
  %v2351 = vrot.slane %v2273, 1
  %v2352 = vsel %vm2081, %v2350, %v2351
  %v2353 = vrot.slane %v2274, 1
  %v2354 = vrot.slane %v2275, 1
  %v2355 = vsel %vm2081, %v2353, %v2354
  %v2372 = vadd.f32 %v2222, %v2310
  %v2373 = vadd.f32 %v2223, %v2313
  %v2374 = vadd.f32 %v2224, %v2316
  %v2375 = vadd.f32 %v2225, %v2319
  %v2376 = vadd.f32 %v2226, %v2322
  %v2377 = vadd.f32 %v2227, %v2325
  %v2378 = vadd.f32 %v2228, %v2328
  %v2379 = vadd.f32 %v2229, %v2331
  %v2380 = vadd.f32 %v2230, %v2334
  %v2381 = vadd.f32 %v2231, %v2337
  %v2382 = vadd.f32 %v2232, %v2340
  %v2383 = vadd.f32 %v2233, %v2343
  %v2384 = vadd.f32 %v2234, %v2346
  %v2385 = vadd.f32 %v2235, %v2349
  %v2386 = vadd.f32 %v2236, %v2352
  %v2387 = vadd.f32 %v2237, %v2355
  %v2389 = vlaneseq
  %v2390 = vshrl.u32 %v2389, 7
  %v2391 = vsub.s32 0, %v2390
  %v2392 = vrot.slane %v1948, %v2391
  %v2394 = vmul.f32 %v1842, %v2392
  %v2395 = vmul.f32 %v1844, %v2392
  %v2396 = vmul.f32 %v1846, %v2392
  %v2397 = vmul.f32 %v1848, %v2392
  %v2398 = vmul.f32 %v1850, %v2392
  %v2399 = vmul.f32 %v1852, %v2392
  %v2400 = vmul.f32 %v1854, %v2392
  %v2401 = vmul.f32 %v1856, %v2392
  %v2402 = vmul.f32 %v1893, %v2392
  %v2403 = vmul.f32 %v1895, %v2392
  %v2404 = vmul.f32 %v1897, %v2392
  %v2405 = vmul.f32 %v1899, %v2392
  %v2406 = vmul.f32 %v1901, %v2392
  %v2407 = vmul.f32 %v1903, %v2392
  %v2408 = vmul.f32 %v1905, %v2392
  %v2409 = vmul.f32 %v1907, %v2392
  %v2410 = vadd.f32 %v2372, %v2394
  %v2411 = vadd.f32 %v2373, %v2395
  %v2412 = vadd.f32 %v2374, %v2396
  %v2413 = vadd.f32 %v2375, %v2397
  %v2414 = vadd.f32 %v2376, %v2398
  %v2415 = vadd.f32 %v2377, %v2399
  %v2416 = vadd.f32 %v2378, %v2400
  %v2417 = vadd.f32 %v2379, %v2401
  %v2418 = vadd.f32 %v2380, %v2402
  %v2419 = vadd.f32 %v2381, %v2403
  %v2420 = vadd.f32 %v2382, %v2404
  %v2421 = vadd.f32 %v2383, %v2405
  %v2422 = vadd.f32 %v2384, %v2406
  %v2423 = vadd.f32 %v2385, %v2407
  %v2424 = vadd.f32 %v2386, %v2408
  %v2425 = vadd.f32 %v2387, %v2409
  %v2427 = vlaneseq
  %v2428 = vshrl.u32 %v2427, 7
  %v2429 = vsub.s32 0, %v2428
  %v2430 = vrot.slane %v1949, %v2429
  %v2432 = vmul.f32 %v1859, %v2430
  %v2433 = vmul.f32 %v1860, %v2430
  %v2434 = vmul.f32 %v1861, %v2430
  %v2435 = vmul.f32 %v1862, %v2430
  %v2436 = vmul.f32 %v1863, %v2430
  %v2437 = vmul.f32 %v1864, %v2430
  %v2438 = vmul.f32 %v1865, %v2430
  %v2439 = vmul.f32 %v1866, %v2430
  %v2440 = vmul.f32 %v1910, %v2430
  %v2441 = vmul.f32 %v1911, %v2430
  %v2442 = vmul.f32 %v1912, %v2430
  %v2443 = vmul.f32 %v1913, %v2430
  %v2444 = vmul.f32 %v1914, %v2430
  %v2445 = vmul.f32 %v1915, %v2430
  %v2446 = vmul.f32 %v1916, %v2430
  %v2447 = vmul.f32 %v1917, %v2430
  %v2448 = vadd.f32 %v2410, %v2432
  %v2449 = vadd.f32 %v2411, %v2433
  %v2450 = vadd.f32 %v2412, %v2434
  %v2451 = vadd.f32 %v2413, %v2435
  %v2452 = vadd.f32 %v2414, %v2436
  %v2453 = vadd.f32 %v2415, %v2437
  %v2454 = vadd.f32 %v2416, %v2438
  %v2455 = vadd.f32 %v2417, %v2439
  %v2456 = vadd.f32 %v2418, %v2440
  %v2457 = vadd.f32 %v2419, %v2441
  %v2458 = vadd.f32 %v2420, %v2442
  %v2459 = vadd.f32 %v2421, %v2443
  %v2460 = vadd.f32 %v2422, %v2444
  %v2461 = vadd.f32 %v2423, %v2445
  %v2462 = vadd.f32 %v2424, %v2446
  %v2463 = vadd.f32 %v2425, %v2447
  %v2465 = vlaneseq
  %v2466 = vshrl.u32 %v2465, 7
  %v2467 = vsub.s32 0, %v2466
  %v2468 = vrot.slane %v1950, %v2467
  %v2470 = vmul.f32 %v1842, %v2468
  %v2471 = vmul.f32 %v1843, %v2468
  %v2472 = vmul.f32 %v1844, %v2468
  %v2473 = vmul.f32 %v1845, %v2468
  %v2474 = vmul.f32 %v1846, %v2468
  %v2475 = vmul.f32 %v1847, %v2468
  %v2476 = vmul.f32 %v1848, %v2468
  %v2477 = vmul.f32 %v1849, %v2468
  %v2478 = vmul.f32 %v1850, %v2468
  %v2479 = vmul.f32 %v1851, %v2468
  %v2480 = vmul.f32 %v1852, %v2468
  %v2481 = vmul.f32 %v1853, %v2468
  %v2482 = vmul.f32 %v1854, %v2468
  %v2483 = vmul.f32 %v1855, %v2468
  %v2484 = vmul.f32 %v1856, %v2468
  %v2485 = vmul.f32 %v1857, %v2468
  %v2486 = vmul.f32 %v1893, %v2468
  %v2487 = vmul.f32 %v1894, %v2468
  %v2488 = vmul.f32 %v1895, %v2468
  %v2489 = vmul.f32 %v1896, %v2468
  %v2490 = vmul.f32 %v1897, %v2468
  %v2491 = vmul.f32 %v1898, %v2468
  %v2492 = vmul.f32 %v1899, %v2468
  %v2493 = vmul.f32 %v1900, %v2468
  %v2494 = vmul.f32 %v1901, %v2468
  %v2495 = vmul.f32 %v1902, %v2468
  %v2496 = vmul.f32 %v1903, %v2468
  %v2497 = vmul.f32 %v1904, %v2468
  %v2498 = vmul.f32 %v1905, %v2468
  %v2499 = vmul.f32 %v1906, %v2468
  %v2500 = vmul.f32 %v1907, %v2468
  %v2501 = vmul.f32 %v1908, %v2468
  %v2534 = vrot.slane %v2470, 1
  %v2535 = vrot.slane %v2471, 1
  %v2536 = vsel %vm2081, %v2534, %v2535
  %v2537 = vrot.slane %v2472, 1
  %v2538 = vrot.slane %v2473, 1
  %v2539 = vsel %vm2081, %v2537, %v2538
  %v2540 = vrot.slane %v2474, 1
  %v2541 = vrot.slane %v2475, 1
  %v2542 = vsel %vm2081, %v2540, %v2541
  %v2543 = vrot.slane %v2476, 1
  %v2544 = vrot.slane %v2477, 1
  %v2545 = vsel %vm2081, %v2543, %v2544
  %v2546 = vrot.slane %v2478, 1
  %v2547 = vrot.slane %v2479, 1
  %v2548 = vsel %vm2081, %v2546, %v2547
  %v2549 = vrot.slane %v2480, 1
  %v2550 = vrot.slane %v2481, 1
  %v2551 = vsel %vm2081, %v2549, %v2550
  %v2552 = vrot.slane %v2482, 1
  %v2553 = vrot.slane %v2483, 1
  %v2554 = vsel %vm2081, %v2552, %v2553
  %v2555 = vrot.slane %v2484, 1
  %v2556 = vrot.slane %v2485, 1
  %v2557 = vsel %vm2081, %v2555, %v2556
  %v2558 = vrot.slane %v2486, 1
  %v2559 = vrot.slane %v2487, 1
  %v2560 = vsel %vm2081, %v2558, %v2559
  %v2561 = vrot.slane %v2488, 1
  %v2562 = vrot.slane %v2489, 1
  %v2563 = vsel %vm2081, %v2561, %v2562
  %v2564 = vrot.slane %v2490, 1
  %v2565 = vrot.slane %v2491, 1
  %v2566 = vsel %vm2081, %v2564, %v2565
  %v2567 = vrot.slane %v2492, 1
  %v2568 = vrot.slane %v2493, 1
  %v2569 = vsel %vm2081, %v2567, %v2568
  %v2570 = vrot.slane %v2494, 1
  %v2571 = vrot.slane %v2495, 1
  %v2572 = vsel %vm2081, %v2570, %v2571
  %v2573 = vrot.slane %v2496, 1
  %v2574 = vrot.slane %v2497, 1
  %v2575 = vsel %vm2081, %v2573, %v2574
  %v2576 = vrot.slane %v2498, 1
  %v2577 = vrot.slane %v2499, 1
  %v2578 = vsel %vm2081, %v2576, %v2577
  %v2579 = vrot.slane %v2500, 1
  %v2580 = vrot.slane %v2501, 1
  %v2581 = vsel %vm2081, %v2579, %v2580
  %v2598 = vadd.f32 %v2448, %v2536
  %v2599 = vadd.f32 %v2449, %v2539
  %v2600 = vadd.f32 %v2450, %v2542
  %v2601 = vadd.f32 %v2451, %v2545
  %v2602 = vadd.f32 %v2452, %v2548
  %v2603 = vadd.f32 %v2453, %v2551
  %v2604 = vadd.f32 %v2454, %v2554
  %v2605 = vadd.f32 %v2455, %v2557
  %v2606 = vadd.f32 %v2456, %v2560
  %v2607 = vadd.f32 %v2457, %v2563
  %v2608 = vadd.f32 %v2458, %v2566
  %v2609 = vadd.f32 %v2459, %v2569
  %v2610 = vadd.f32 %v2460, %v2572
  %v2611 = vadd.f32 %v2461, %v2575
  %v2612 = vadd.f32 %v2462, %v2578
  %v2613 = vadd.f32 %v2463, %v2581
  %v2614 = vld [vmem:[%s5] sm:$0x1]
  %v2616 = vlaneseq
  %v2617 = vshrl.u32 %v2616, 7
  %v2618 = vsub.s32 0, %v2617
  %v2619 = vrot.slane %v2614, %v2618
  %v2621 = vadd.f32 %v2598, %v2619
  %v2622 = vadd.f32 %v2599, %v2619
  %v2623 = vadd.f32 %v2600, %v2619
  %v2624 = vadd.f32 %v2601, %v2619
  %v2625 = vadd.f32 %v2602, %v2619
  %v2626 = vadd.f32 %v2603, %v2619
  %v2627 = vadd.f32 %v2604, %v2619
  %v2628 = vadd.f32 %v2605, %v2619
  %v2629 = vadd.f32 %v2606, %v2619
  %v2630 = vadd.f32 %v2607, %v2619
  %v2631 = vadd.f32 %v2608, %v2619
  %v2632 = vadd.f32 %v2609, %v2619
  %v2633 = vadd.f32 %v2610, %v2619
  %v2634 = vadd.f32 %v2611, %v2619
  %v2635 = vadd.f32 %v2612, %v2619
  %v2636 = vadd.f32 %v2613, %v2619
  %v2637 = vmax.f32 %v2621, 0.0
  %v2638 = vmax.f32 %v2622, 0.0
  %v2639 = vmax.f32 %v2623, 0.0
  %v2640 = vmax.f32 %v2624, 0.0
  %v2641 = vmax.f32 %v2625, 0.0
  %v2642 = vmax.f32 %v2626, 0.0
  %v2643 = vmax.f32 %v2627, 0.0
  %v2644 = vmax.f32 %v2628, 0.0
  %v2645 = vmax.f32 %v2629, 0.0
  %v2646 = vmax.f32 %v2630, 0.0
  %v2647 = vmax.f32 %v2631, 0.0
  %v2648 = vmax.f32 %v2632, 0.0
  %v2649 = vmax.f32 %v2633, 0.0
  %v2650 = vmax.f32 %v2634, 0.0
  %v2651 = vmax.f32 %v2635, 0.0
  %v2652 = vmax.f32 %v2636, 0.0
  %v2653 = vmin.f32 %v2637, 6.0
  %v2654 = vmin.f32 %v2638, 6.0
  %v2655 = vmin.f32 %v2639, 6.0
  %v2656 = vmin.f32 %v2640, 6.0
  %v2657 = vmin.f32 %v2641, 6.0
  %v2658 = vmin.f32 %v2642, 6.0
  %v2659 = vmin.f32 %v2643, 6.0
  %v2660 = vmin.f32 %v2644, 6.0
  %v2661 = vmin.f32 %v2645, 6.0
  %v2662 = vmin.f32 %v2646, 6.0
  %v2663 = vmin.f32 %v2647, 6.0
  %v2664 = vmin.f32 %v2648, 6.0
  %v2665 = vmin.f32 %v2649, 6.0
  %v2666 = vmin.f32 %v2650, 6.0
  %v2667 = vmin.f32 %v2651, 6.0
  %v2668 = vmin.f32 %v2652, 6.0
  %v2669 = vpack.c.bf16 %v2654, %v2653
  %v2670 = vpack.c.bf16 %v2656, %v2655
  %v2671 = vpack.c.bf16 %v2658, %v2657
  %v2672 = vpack.c.bf16 %v2660, %v2659
  %v2673 = vpack.c.bf16 %v2662, %v2661
  %v2674 = vpack.c.bf16 %v2664, %v2663
  %v2675 = vpack.c.bf16 %v2666, %v2665
  %v2676 = vpack.c.bf16 %v2668, %v2667
  %v2677 = vld [vmem:[%s6] sm:$0xf]
  %v2678 = vld [vmem:[%s6 + $0x4] sm:$0xf]
  %v2679 = vld [vmem:[%s6 + $0x8] sm:$0xf]
  %v2680 = vld [vmem:[%s6 + $0xc] sm:$0xf]
  %v2681 = vld [vmem:[%s6 + $0x10] sm:$0xf]
  %v2682 = vld [vmem:[%s6 + $0x14] sm:$0xf]
  %v2683 = vld [vmem:[%s6 + $0x18] sm:$0xf]
  %v2684 = vld [vmem:[%s6 + $0x1c] sm:$0xf]
  %v2685 = vld [vmem:[%s6 + $0x20] sm:$0xf]
  %v2686 = vld [vmem:[%s6 + $0x24] sm:$0xf]
  %v2687 = vld [vmem:[%s6 + $0x28] sm:$0xf]
  %v2688 = vld [vmem:[%s6 + $0x2c] sm:$0xf]
  %v2689 = vld [vmem:[%s6 + $0x30] sm:$0xf]
  %v2690 = vld [vmem:[%s6 + $0x34] sm:$0xf]
  %v2691 = vld [vmem:[%s6 + $0x38] sm:$0xf]
  %v2692 = vld [vmem:[%s6 + $0x3c] sm:$0xf]
  %v2693 = vld [vmem:[%s7] sm:$0x1]
  %v2695 = vlaneseq
  %v2696 = vshrl.u32 %v2695, 7
  %v2697 = vsub.s32 0, %v2696
  %v2698 = vrot.slane %v2693, %v2697
  %v2716 = vunpack.c.l.b16 %v2677
  %v2717 = vunpack.c.l.b16 %v2678
  %v2718 = vunpack.c.l.b16 %v2679
  %v2719 = vunpack.c.l.b16 %v2680
  %v2720 = vunpack.c.l.b16 %v2681
  %v2721 = vunpack.c.l.b16 %v2682
  %v2722 = vunpack.c.l.b16 %v2683
  %v2723 = vunpack.c.l.b16 %v2684
  %v2724 = vunpack.c.l.b16 %v2685
  %v2725 = vunpack.c.l.b16 %v2686
  %v2726 = vunpack.c.l.b16 %v2687
  %v2727 = vunpack.c.l.b16 %v2688
  %v2728 = vunpack.c.l.b16 %v2689
  %v2729 = vunpack.c.l.b16 %v2690
  %v2730 = vunpack.c.l.b16 %v2691
  %v2731 = vunpack.c.l.b16 %v2692
  %v2732 = vpack.c.b16 %v2717, %v2716
  %v2733 = vpack.c.b16 %v2719, %v2718
  %v2734 = vpack.c.b16 %v2721, %v2720
  %v2735 = vpack.c.b16 %v2723, %v2722
  %v2736 = vpack.c.b16 %v2725, %v2724
  %v2737 = vpack.c.b16 %v2727, %v2726
  %v2738 = vpack.c.b16 %v2729, %v2728
  %v2739 = vpack.c.b16 %v2731, %v2730
  %2748 = vmatprep.subr.bf16.mxu0 0
  %2749 = vmatpush1.bf16.msra.mxu0 %v2739
  %2750 = vmatprep.subr.bf16.mxu0 0
  %2751 = vmatpush1.bf16.msra.mxu0 %v2738
  %2752 = vmatprep.subr.bf16.mxu0 0
  %2753 = vmatpush1.bf16.msra.mxu0 %v2737
  %2754 = vmatprep.subr.bf16.mxu0 0
  %2755 = vmatpush1.bf16.msra.mxu0 %v2736
  %2756 = vmatprep.subr.bf16.mxu0 0
  %2757 = vmatpush1.bf16.msra.mxu0 %v2735
  %2758 = vmatprep.subr.bf16.mxu0 0
  %2759 = vmatpush1.bf16.msra.mxu0 %v2734
  %2760 = vmatprep.subr.bf16.mxu0 0
  %2761 = vmatpush1.bf16.msra.mxu0 %v2733
  %2762 = vmatprep.subr.bf16.mxu0 0
  %2763 = vmatpush1.bf16.msra.mxu0 %v2732
  %2764 = vmatprep.subr.bf16.mxu0 0
  %2765 = vmatpush2.bf16.msra.mxu0 0
  %2766 = vmatprep.subr.bf16.mxu0 0
  %2767 = vmatpush2.bf16.msra.mxu0 0
  %2768 = vmatprep.subr.bf16.mxu0 0
  %2769 = vmatpush2.bf16.msra.mxu0 0
  %2770 = vmatprep.subr.bf16.mxu0 0
  %2771 = vmatpush2.bf16.msra.mxu0 0
  %2772 = vmatprep.subr.bf16.mxu0 0
  %2773 = vmatpush2.bf16.msra.mxu0 0
  %2774 = vmatprep.subr.bf16.mxu0 0
  %2775 = vmatpush2.bf16.msra.mxu0 0
  %2776 = vmatprep.subr.bf16.mxu0 0
  %2777 = vmatpush2.bf16.msra.mxu0 0
  %2778 = vmatprep.subr.bf16.mxu0 0
  %2779 = vmatpush2.bf16.msra.mxu0 0
  %2780 = vmatprep.mubr.bf16.mxu0 0
  %2781 = vmatmul.mubr.bf16.gmra.mxu0 %v2669
  %v2782 = vpop.f32.mrf.mxu0
  %v2783 = vadd.f32 %v2698, %v2782
  %v2784 = vpop.f32.mrf.mxu0
  %v2785 = vpop.f32.mrf.mxu0
  %v2786 = vadd.f32 %v2698, %v2785
  %v2787 = vpop.f32.mrf.mxu0
  %2788 = vmatprep.mubr.bf16.mxu0 0
  %2789 = vmatmul.mubr.bf16.gmra.mxu0 %v2670
  %v2790 = vpop.f32.mrf.mxu0
  %v2791 = vadd.f32 %v2698, %v2790
  %v2792 = vpop.f32.mrf.mxu0
  %v2793 = vpop.f32.mrf.mxu0
  %v2794 = vadd.f32 %v2698, %v2793
  %v2795 = vpop.f32.mrf.mxu0
  %2796 = vmatprep.mubr.bf16.mxu0 0
  %2797 = vmatmul.mubr.bf16.gmra.mxu0 %v2671
  %v2798 = vpop.f32.mrf.mxu0
  %v2799 = vadd.f32 %v2698, %v2798
  %v2800 = vpop.f32.mrf.mxu0
  %v2801 = vpop.f32.mrf.mxu0
  %v2802 = vadd.f32 %v2698, %v2801
  %v2803 = vpop.f32.mrf.mxu0
  %2804 = vmatprep.mubr.bf16.mxu0 0
  %2805 = vmatmul.mubr.bf16.gmra.mxu0 %v2672
  %v2806 = vpop.f32.mrf.mxu0
  %v2807 = vadd.f32 %v2698, %v2806
  %v2808 = vpop.f32.mrf.mxu0
  %v2809 = vpop.f32.mrf.mxu0
  %v2810 = vadd.f32 %v2698, %v2809
  %v2811 = vpop.f32.mrf.mxu0
  %2812 = vmatprep.mubr.bf16.mxu0 0
  %2813 = vmatmul.mubr.bf16.gmra.mxu0 %v2673
  %v2814 = vpop.f32.mrf.mxu0
  %v2815 = vadd.f32 %v2698, %v2814
  %v2816 = vpop.f32.mrf.mxu0
  %v2817 = vpop.f32.mrf.mxu0
  %v2818 = vadd.f32 %v2698, %v2817
  %v2819 = vpop.f32.mrf.mxu0
  %2820 = vmatprep.mubr.bf16.mxu0 0
  %2821 = vmatmul.mubr.bf16.gmra.mxu0 %v2674
  %v2822 = vpop.f32.mrf.mxu0
  %v2823 = vadd.f32 %v2698, %v2822
  %v2824 = vpop.f32.mrf.mxu0
  %v2825 = vpop.f32.mrf.mxu0
  %v2826 = vadd.f32 %v2698, %v2825
  %v2827 = vpop.f32.mrf.mxu0
  %2828 = vmatprep.mubr.bf16.mxu0 0
  %2829 = vmatmul.mubr.bf16.gmra.mxu0 %v2675
  %v2830 = vpop.f32.mrf.mxu0
  %v2831 = vadd.f32 %v2698, %v2830
  %v2832 = vpop.f32.mrf.mxu0
  %v2833 = vpop.f32.mrf.mxu0
  %v2834 = vadd.f32 %v2698, %v2833
  %v2835 = vpop.f32.mrf.mxu0
  %2836 = vmatprep.mubr.bf16.mxu0 0
  %2837 = vmatmul.mubr.bf16.gmra.mxu0 %v2676
  %v2838 = vpop.f32.mrf.mxu0
  %v2839 = vadd.f32 %v2698, %v2838
  %v2840 = vpop.f32.mrf.mxu0
  %v2841 = vpop.f32.mrf.mxu0
  %v2842 = vadd.f32 %v2698, %v2841
  %v2843 = vpop.f32.mrf.mxu0
  %2844 = vdwg.mxu0
  %v2845 = vmax.f32 %v2783, 0.0
  %v2846 = vmax.f32 %v2786, 0.0
  %v2847 = vmax.f32 %v2791, 0.0
  %v2848 = vmax.f32 %v2794, 0.0
  %v2849 = vmax.f32 %v2799, 0.0
  %v2850 = vmax.f32 %v2802, 0.0
  %v2851 = vmax.f32 %v2807, 0.0
  %v2852 = vmax.f32 %v2810, 0.0
  %v2853 = vmax.f32 %v2815, 0.0
  %v2854 = vmax.f32 %v2818, 0.0
  %v2855 = vmax.f32 %v2823, 0.0
  %v2856 = vmax.f32 %v2826, 0.0
  %v2857 = vmax.f32 %v2831, 0.0
  %v2858 = vmax.f32 %v2834, 0.0
  %v2859 = vmax.f32 %v2839, 0.0
  %v2860 = vmax.f32 %v2842, 0.0
  %v2861 = vmin.f32 %v2845, 6.0
  %v2862 = vmin.f32 %v2846, 6.0
  %v2863 = vmin.f32 %v2847, 6.0
  %v2864 = vmin.f32 %v2848, 6.0
  %v2865 = vmin.f32 %v2849, 6.0
  %v2866 = vmin.f32 %v2850, 6.0
  %v2867 = vmin.f32 %v2851, 6.0
  %v2868 = vmin.f32 %v2852, 6.0
  %v2869 = vmin.f32 %v2853, 6.0
  %v2870 = vmin.f32 %v2854, 6.0
  %v2871 = vmin.f32 %v2855, 6.0
  %v2872 = vmin.f32 %v2856, 6.0
  %v2873 = vmin.f32 %v2857, 6.0
  %v2874 = vmin.f32 %v2858, 6.0
  %v2875 = vmin.f32 %v2859, 6.0
  %v2876 = vmin.f32 %v2860, 6.0
  %2877 = vst [vmem:[%s8] sm:$0xff] %v2861
  %2878 = vst [vmem:[%s8 + $0x8] sm:$0xff] %v2862
  %2879 = vst [vmem:[%s8 + $0x10] sm:$0xff] %v2863
  %2880 = vst [vmem:[%s8 + $0x18] sm:$0xff] %v2864
  %2881 = vst [vmem:[%s8 + $0x20] sm:$0xff] %v2865
  %2882 = vst [vmem:[%s8 + $0x28] sm:$0xff] %v2866
  %2883 = vst [vmem:[%s8 + $0x30] sm:$0xff] %v2867
  %2884 = vst [vmem:[%s8 + $0x38] sm:$0xff] %v2868
  %2885 = vst [vmem:[%s8 + $0x40] sm:$0xff] %v2869
  %2886 = vst [vmem:[%s8 + $0x48] sm:$0xff] %v2870
  %2887 = vst [vmem:[%s8 + $0x50] sm:$0xff] %v2871
  %2888 = vst [vmem:[%s8 + $0x58] sm:$0xff] %v2872
  %2889 = vst [vmem:[%s8 + $0x60] sm:$0xff] %v2873
  %2890 = vst [vmem:[%s8 + $0x68] sm:$0xff] %v2874
  %2891 = vst [vmem:[%s8 + $0x70] sm:$0xff] %v2875
  %2892 = vst [vmem:[%s8 + $0x78] sm:$0xff] %v2876
  // Predicated region
  $region34: #{inverted_residual_extra.1} parent=0 // pred_check
    _
  $region35: #{inverted_residual_extra.1} parent=0 // pred_check_branch
    %2894 = sbr.rel (0) target = $region37
  $region36: #{inverted_residual_extra.1} parent=0 // pred_region
    _
  $region37: #{inverted_residual_extra.1} parent=0 // pred_fallthru
    _
  // Predicated region
  $region38: #{inverted_residual_extra.1} parent=0 // pred_check
    _
  $region39: #{inverted_residual_extra.1} parent=0 // pred_check_branch
    %2896 = sbr.rel (0) target = $region41
  $region40: #{inverted_residual_extra.1} parent=0 // pred_region
    _
  $region41: #{inverted_residual_extra.1} parent=0 // pred_fallthru
    _

</llo_original>
